<compile_context>
chip_gen: v7x
topology: tpu7x:2x2x1
jax: 0.10.0
libtpu: 0.0.40
codegen_flags: <defaults>
</compile_context>

<pallas_src>
import functools

import jax
import jax.numpy as jnp
import numpy as np
from jax.experimental import pallas as pl
from jax.experimental.pallas import tpu as pltpu


def _cdiv(a, b):
    return -(-a // b)


def _round_up(x, m):
    return ((x + m - 1) // m) * m


def _pad2(a, rows, cols):
    return jnp.pad(a, ((0, rows - a.shape[0]), (0, cols - a.shape[1])))


_VMEM_LIMIT = 48 * 1024 * 1024  # > default scoped limit on all gens, usage ~12 MiB


# ---------------------------------------------------------------------------
# Row-tiled linear kernel:  h = x @ w   (bf16 operands, f32 accumulate, bf16 out)
# ---------------------------------------------------------------------------
def _linear_kernel(x_ref, w_ref, o_ref):
    o_ref[...] = jnp.dot(
        x_ref[...], w_ref[...], preferred_element_type=jnp.float32
    ).astype(o_ref.dtype)


def linear(x_bf16, w_bf16, *, out_dtype=jnp.bfloat16, tm=512):
    """x (N, Fp) bf16, w (Fp, Cp) bf16 -> (N, Cp) out_dtype.

    Fp / Cp already padded to multiples of 128 (lane dense). Rows padded to the
    tile size here and sliced off on return.
    """
    n, f = x_bf16.shape
    c = w_bf16.shape[1]
    # >= 2 row tiles when possible (megacore), rows multiple of 16 (bf16 packing)
    tm = max(16, min(tm, _round_up(_cdiv(n, 2), 16)))
    n_p = _round_up(n, tm)
    x_p = jnp.pad(x_bf16, ((0, n_p - n), (0, 0)))

    out = pl.pallas_call(
        _linear_kernel,
        out_shape=jax.ShapeDtypeStruct((n_p, c), out_dtype),
        grid_spec=pltpu.PrefetchScalarGridSpec(
            num_scalar_prefetch=0,
            grid=(n_p // tm,),
            in_specs=[
                pl.BlockSpec((tm, f), lambda i: (i, 0)),
                pl.BlockSpec((f, c), lambda i: (0, 0)),
            ],
            out_specs=pl.BlockSpec((tm, c), lambda i: (i, 0)),
        ),
        compiler_params=pltpu.CompilerParams(
            dimension_semantics=("parallel",),
            vmem_limit_bytes=_VMEM_LIMIT,
        ),
    )(x_p, w_bf16)
    return out[:n]


# ---------------------------------------------------------------------------
# Fused aggregation kernel:
#   out = inv_deg * (adj01 @ h_src) + (x_dst @ w_r + b)     (+ leaky_relu)
#   grid = (dst tiles, src tiles); f32 VMEM accumulator; lin_r + bias + scale
#   + activation + downcast all in the k==last epilogue.
# ---------------------------------------------------------------------------
def _sage_agg_kernel(adj_ref, hsrc_ref, xdst_ref, wr_ref, b_ref, invdeg_ref,
                     o_ref, acc_ref, *, apply_act):
    k = pl.program_id(1)

    @pl.when(k == 0)
    def _():
        acc_ref[...] = jnp.zeros_like(acc_ref)

    acc_ref[...] += jnp.dot(
        adj_ref[...], hsrc_ref[...], preferred_element_type=jnp.float32
    )

    @pl.when(k == pl.num_programs(1) - 1)
    def _():
        # mean = inv_deg * sum;  lin_r(x_dst) + bias fused here (once per dst tile)
        out = acc_ref[...] * invdeg_ref[...] + (
            jnp.dot(xdst_ref[...], wr_ref[...], preferred_element_type=jnp.float32)
            + b_ref[...]
        )
        if apply_act:
            out = jnp.where(out >= 0.0, out, 0.01 * out)  # F.leaky_relu, slope 0.01
        o_ref[...] = out.astype(o_ref.dtype)


def sage_conv(adj_bf16, inv_deg_f32, h_src_bf16, x_dst_bf16, w_r_bf16, b_f32,
              *, apply_act, out_dtype, tm=512, tk=4096):
    """One bipartite mean-aggregation SAGEConv.

    adj_bf16:   (n_dst, n_src) exact 0/1(/count) adjacency, bf16
    inv_deg_f32:(n_dst, 1)     1/deg (0 for isolated dst), f32
    h_src_bf16: (n_src, Cp)    lin_l(x_src), bf16
    x_dst_bf16: (n_dst, Fp)    destination features, bf16
    w_r_bf16:   (Fp, Cp)       lin_r weight, bf16
    b_f32:      (1, Cp)        bias, f32
    """
    n_dst, n_src = adj_bf16.shape
    c = w_r_bf16.shape[1]
    f_dst = x_dst_bf16.shape[1]

    tm = max(16, min(tm, _round_up(_cdiv(n_dst, 2), 16)))   # >=2 dst tiles, x16 rows
    tk = min(tk, _round_up(n_src, 128))
    n_dst_p = _round_up(n_dst, tm)
    n_src_p = _round_up(n_src, tk)

    adj_p = _pad2(adj_bf16, n_dst_p, n_src_p)                # zero pad -> no effect
    hs_p = jnp.pad(h_src_bf16, ((0, n_src_p - n_src), (0, 0)))
    xd_p = jnp.pad(x_dst_bf16, ((0, n_dst_p - n_dst), (0, 0)))
    id_p = jnp.pad(inv_deg_f32, ((0, n_dst_p - n_dst), (0, 0)))

    kernel = functools.partial(_sage_agg_kernel, apply_act=apply_act)
    out = pl.pallas_call(
        kernel,
        out_shape=jax.ShapeDtypeStruct((n_dst_p, c), out_dtype),
        grid_spec=pltpu.PrefetchScalarGridSpec(
            num_scalar_prefetch=0,
            grid=(n_dst_p // tm, n_src_p // tk),
            in_specs=[
                pl.BlockSpec((tm, tk), lambda i, k: (i, k)),     # adj tile
                pl.BlockSpec((tk, c), lambda i, k: (k, 0)),      # h_src tile
                pl.BlockSpec((tm, f_dst), lambda i, k: (i, 0)),  # x_dst tile
                pl.BlockSpec((f_dst, c), lambda i, k: (0, 0)),   # w_r (resident)
                pl.BlockSpec((1, c), lambda i, k: (0, 0)),       # bias (resident)
                pl.BlockSpec((tm, 1), lambda i, k: (i, 0)),      # 1/deg tile
            ],
            out_specs=pl.BlockSpec((tm, c), lambda i, k: (i, 0)),
            scratch_shapes=[pltpu.VMEM((tm, c), jnp.float32)],
        ),
        compiler_params=pltpu.CompilerParams(
            dimension_semantics=("parallel", "arbitrary"),
            vmem_limit_bytes=_VMEM_LIMIT,
        ),
    )(adj_p, hs_p, xd_p, w_r_bf16, b_f32, id_p)
    return out[:n_dst]


# ---------------------------------------------------------------------------
# Graph / parameter construction (host-side preprocessing)
# ---------------------------------------------------------------------------
def build_adj(edge_index, n_dst, n_src):
    """edge_index (2, E): row 0 = src ids, row 1 = dst ids.
    Returns (adj01 counts (n_dst, n_src) f32, inv_deg (n_dst, 1) f32).
    Zero-degree destinations get inv_deg = 0 (PyG scatter-mean -> 0)."""
    src, dst = edge_index[0], edge_index[1]
    a = jnp.zeros((n_dst, n_src), jnp.float32).at[dst, src].add(1.0)
    deg = a.sum(axis=1, keepdims=True)
    inv_deg = jnp.where(deg > 0.0, 1.0 / jnp.maximum(deg, 1.0), 0.0)
    return a, inv_deg


def init_params(key, num_layers, user_dim, movie_dim, channels):
    """Deterministic synthetic init, shapes match the torch module's __init__."""
    params = []
    for layer in range(num_layers):
        in_user, in_movie = (user_dim, movie_dim) if layer == 0 else (channels, channels)
        keys = jax.random.split(key, 8)
        key = keys[0]

        def lin(k, fan_in, fan_out):
            bound = 1.0 / np.sqrt(fan_in)
            return jax.random.uniform(k, (fan_in, fan_out), jnp.float32, -bound, bound)

        params.append(dict(
            # edge ('user', 'watched', 'movie'): src=user, dst=movie
            um_wl=lin(keys[1], in_user, channels),
            um_wr=lin(keys[2], in_movie, channels),
            um_b=lin(keys[3], 1, channels),
            # edge ('movie', 'rev_watched', 'user'): src=movie, dst=user
            mu_wl=lin(keys[4], in_movie, channels),
            mu_wr=lin(keys[5], in_user, channels),
            mu_b=lin(keys[6], 1, channels),
        ))
    return params


# ---------------------------------------------------------------------------
# Full forward (Pallas) and pure-JAX reference
# ---------------------------------------------------------------------------
def gnn_sage_forward(x_user, x_movie,
                     adj_mu, inv_deg_m, adj_um, inv_deg_u,
                     params, channels):
    """adj_mu: (num_movies, num_users) 0/1 counts for 'watched';
    adj_um: (num_users, num_movies) for 'rev_watched'. Returns x_dict."""
    num_layers = len(params)
    c_p = _round_up(channels, 128)  # lane-dense padded channel width
    adj_mu_bf = adj_mu.astype(jnp.bfloat16)   # small integer counts: exact in bf16
    adj_um_bf = adj_um.astype(jnp.bfloat16)

    # layer-0 features: pad feature dim to lane width + cast to bf16 once;
    # layer>0 features come out of the agg kernel already C_p-wide bf16.
    xu = _pad2(x_user, x_user.shape[0], _round_up(x_user.shape[1], 128)).astype(jnp.bfloat16)
    xm = _pad2(x_movie, x_movie.shape[0], _round_up(x_movie.shape[1], 128)).astype(jnp.bfloat16)

    for i, p in enumerate(params):
        is_last = (i == num_layers - 1)
        apply_act = not is_last
        out_dtype = jnp.float32 if is_last else jnp.bfloat16
        f_u, f_m = xu.shape[1], xm.shape[1]

        # ('user','watched','movie'): src = user, dst = movie
        um_wl = _pad2(p["um_wl"], f_u, c_p).astype(jnp.bfloat16)
        um_wr = _pad2(p["um_wr"], f_m, c_p).astype(jnp.bfloat16)
        um_b = _pad2(p["um_b"], 1, c_p)
        # ('movie','rev_watched','user'): src = movie, dst = user
        mu_wl = _pad2(p["mu_wl"], f_m, c_p).astype(jnp.bfloat16)
        mu_wr = _pad2(p["mu_wr"], f_u, c_p).astype(jnp.bfloat16)
        mu_b = _pad2(p["mu_b"], 1, c_p)

        # one lin_l per node type per layer; emits bf16 directly
        h_src_u = linear(xu, um_wl)          # lin_l(x_user)  -> (n_user,  c_p) bf16
        h_src_m = linear(xm, mu_wl)          # lin_l(x_movie) -> (n_movie, c_p) bf16

        # aggregation with lin_r + bias + 1/deg + activation fused in-kernel
        new_movie = sage_conv(adj_mu_bf, inv_deg_m, h_src_u, xm, um_wr, um_b,
                              apply_act=apply_act, out_dtype=out_dtype)
        new_user = sage_conv(adj_um_bf, inv_deg_u, h_src_m, xu, mu_wr, mu_b,
                             apply_act=apply_act, out_dtype=out_dtype)

        xm, xu = new_movie, new_user
        # TODO(synk): dropout_p uses torch RNG during training; eval-mode
        # F.dropout is identity, so omitted.
        # TODO(synk): aggr_type='pool-max' (project=True, max aggregation) not
        # implemented; default 'mean' path only.

    # slice padded channel columns back to the true width only at the end
    return {"user": xu[:, :channels].astype(jnp.float32),
            "movie": xm[:, :channels].astype(jnp.float32)}


def reference_forward(x_user, x_movie, adj_mu, inv_deg_m, adj_um, inv_deg_u,
                      params):
    """Pure-JAX reference mirroring the kernel numerics: bf16 operands, f32
    accumulation, bf16 storage of h_src and of non-final layer outputs."""
    num_layers = len(params)
    bf = lambda a: a.astype(jnp.bfloat16)
    f32 = lambda a: a.astype(jnp.float32)
    xu, xm = bf(x_user), bf(x_movie)
    for i, p in enumerate(params):
        h_src_u = bf(f32(xu) @ f32(bf(p["um_wl"])))
        h_src_m = bf(f32(xm) @ f32(bf(p["mu_wl"])))

        nm = (adj_mu @ f32(h_src_u)) * inv_deg_m + f32(xm) @ f32(bf(p["um_wr"])) + p["um_b"]
        nu = (adj_um @ f32(h_src_m)) * inv_deg_u + f32(xu) @ f32(bf(p["mu_wr"])) + p["mu_b"]

        if i != num_layers - 1:
            nm = jnp.where(nm >= 0.0, nm, 0.01 * nm)
            nu = jnp.where(nu >= 0.0, nu, 0.01 * nu)
            xm, xu = bf(nm), bf(nu)
        else:
            xm, xu = nm, nu
    return {"user": f32(xu), "movie": f32(xm)}


if __name__ == "__main__":
    key = jax.random.PRNGKey(0)
    num_users, num_movies = 12, 20
    user_dim, movie_dim, channels = 8, 12, 32
    num_layers, num_edges = 2, 64

    k1, k2, k3, k4, k5 = jax.random.split(key, 5)
    x_user = jax.random.normal(k1, (num_users, user_dim), jnp.float32)
    x_movie = jax.random.normal(k2, (num_movies, movie_dim), jnp.float32)

    src_users = jax.random.randint(k3, (num_edges,), 0, num_users)
    dst_movies = jax.random.randint(k4, (num_edges,), 0, num_movies)
    edge_uwm = jnp.stack([src_users, dst_movies])   # ('user','watched','movie')
    edge_mru = jnp.stack([dst_movies, src_users])   # ('movie','rev_watched','user')

    adj_mu, inv_deg_m = build_adj(edge_uwm, num_movies, num_users)   # movie <- user
    adj_um, inv_deg_u = build_adj(edge_mru, num_users, num_movies)   # user  <- movie

    params = init_params(k5, num_layers, user_dim, movie_dim, channels)

    forward = jax.jit(gnn_sage_forward, static_argnames=("channels",))
    out = forward(x_user, x_movie, adj_mu, inv_deg_m, adj_um, inv_deg_u,
                  params, channels=channels)
    jax.block_until_ready(out)

    ref = reference_forward(x_user, x_movie, adj_mu, inv_deg_m, adj_um, inv_deg_u,
                            params)
    for name in ("user", "movie"):
        # tolerance covers f32 accumulation-order differences and bf16
        # re-rounding of intermediates between layers
        np.testing.assert_allclose(np.asarray(out[name]), np.asarray(ref[name]),
                                   rtol=2e-2, atol=2e-2)
    print("KERNEL_OK")
</pallas_src>

<mosaic_0001>
module attributes {stable_mosaic.version = 11 : i64} {
  func.func @_linear_kernel(%arg0: i32, %arg1: memref<16x128xbf16, #tpu.memory_space<vmem>>, %arg2: memref<128x128xbf16, #tpu.memory_space<vmem>>, %arg3: memref<16x128xbf16, #tpu.memory_space<vmem>>) attributes {dimension_semantics = [#tpu.dimension_semantics<parallel>], iteration_bounds = array<i64: 1>, scalar_prefetch = 0 : i64, scratch_operands = 0 : i64, tpu.core_type = #tpu.core_type<tc>, window_params = [{transform_indices = @transform_0, window_bounds = array<i64: 16, 128>}, {pipeline_mode = #tpu.pipeline_mode<synchronous>, transform_indices = @transform_1, window_bounds = array<i64: 128, 128>}, {transform_indices = @transform_2, window_bounds = array<i64: 16, 128>}]} {
    %c0 = arith.constant 0 : index
    %c0_0 = arith.constant 0 : index
    %0 = vector.load %arg1[%c0, %c0_0] : memref<16x128xbf16, #tpu.memory_space<vmem>>, vector<16x128xbf16>
    %c0_1 = arith.constant 0 : index
    %c0_2 = arith.constant 0 : index
    %1 = vector.load %arg2[%c0_1, %c0_2] : memref<128x128xbf16, #tpu.memory_space<vmem>>, vector<128x128xbf16>
    %cst = arith.constant dense<0.000000e+00> : vector<16x128xf32>
    %2 = tpu.matmul %0, %1, %cst {dimension_numbers = #tpu.dot_dimension_numbers<[1], [0], [0], [1], [0, 0, 1, 1], [], []>} : vector<16x128xbf16>, vector<128x128xbf16>, vector<16x128xf32> -> vector<16x128xf32>
    %3 = arith.truncf %2 : vector<16x128xf32> to vector<16x128xbf16>
    %c0_3 = arith.constant 0 : index
    %c0_4 = arith.constant 0 : index
    %4 = vector.load %arg3[%c0_3, %c0_4] : memref<16x128xbf16, #tpu.memory_space<vmem>>, vector<16x128xbf16>
    tpu.vector_store %arg3[%c0_3, %c0_4], %3 {strides = array<i32>} : memref<16x128xbf16, #tpu.memory_space<vmem>>, vector<16x128xbf16>,
    return
  }
  func.func @transform_0(%arg0: i32) -> (i32, i32) {
    %c0_i32 = arith.constant 0 : i32
    %c0_i32_0 = arith.constant 0 : i32
    return %arg0, %c0_i32 : i32, i32
  }
  func.func @transform_1(%arg0: i32) -> (i32, i32) {
    %c0_i32 = arith.constant 0 : i32
    %c0_i32_0 = arith.constant 0 : i32
    %c0_i32_1 = arith.constant 0 : i32
    return %c0_i32, %c0_i32_0 : i32, i32
  }
  func.func @transform_2(%arg0: i32) -> (i32, i32) {
    %c0_i32 = arith.constant 0 : i32
    %c0_i32_0 = arith.constant 0 : i32
    return %arg0, %c0_i32 : i32, i32
  }
}

module attributes {stable_mosaic.version = 11 : i64} {
  func.func @_sage_agg_kernel(%arg0: i32, %arg1: i32, %arg2: memref<16x128xbf16, #tpu.memory_space<vmem>>, %arg3: memref<128x128xbf16, #tpu.memory_space<vmem>>, %arg4: memref<16x128xbf16, #tpu.memory_space<vmem>>, %arg5: memref<128x128xbf16, #tpu.memory_space<vmem>>, %arg6: memref<1x128xf32, #tpu.memory_space<vmem>>, %arg7: memref<16x1xf32, #tpu.memory_space<vmem>>, %arg8: memref<16x128xbf16, #tpu.memory_space<vmem>>, %arg9: memref<16x128xf32, #tpu.memory_space<vmem>>) attributes {dimension_semantics = [#tpu.dimension_semantics<parallel>, #tpu.dimension_semantics<arbitrary>], iteration_bounds = array<i64: 2, 1>, scalar_prefetch = 0 : i64, scratch_operands = 1 : i64, tpu.core_type = #tpu.core_type<tc>, window_params = [{transform_indices = @transform_0, window_bounds = array<i64: 16, 128>}, {transform_indices = @transform_1, window_bounds = array<i64: 128, 128>}, {transform_indices = @transform_2, window_bounds = array<i64: 16, 128>}, {pipeline_mode = #tpu.pipeline_mode<synchronous>, transform_indices = @transform_3, window_bounds = array<i64: 128, 128>}, {pipeline_mode = #tpu.pipeline_mode<synchronous>, transform_indices = @transform_4, window_bounds = array<i64: 1, 128>}, {transform_indices = @transform_5, window_bounds = array<i64: 16, 1>}, {transform_indices = @transform_6, window_bounds = array<i64: 16, 128>}]} {
    %c0_i32 = arith.constant 0 : i32
    %0 = arith.cmpi eq, %arg1, %c0_i32 : i32
    %1 = arith.extui %0 : i1 to i32
    %c0_i32_0 = arith.constant 0 : i32
    %2 = arith.cmpi ne, %1, %c0_i32_0 : i32
    scf.if %2 {
      %cst_10 = arith.constant 0.000000e+00 : f32
      %12 = vector.broadcast %cst_10 : f32 to vector<16x128xf32>
      %c0_11 = arith.constant 0 : index
      %c0_12 = arith.constant 0 : index
      %13 = vector.load %arg9[%c0_11, %c0_12] : memref<16x128xf32, #tpu.memory_space<vmem>>, vector<16x128xf32>
      tpu.vector_store %arg9[%c0_11, %c0_12], %12 {strides = array<i32>} : memref<16x128xf32, #tpu.memory_space<vmem>>, vector<16x128xf32>,
    } else {
    }
    %c0 = arith.constant 0 : index
    %c0_1 = arith.constant 0 : index
    %3 = vector.load %arg9[%c0, %c0_1] : memref<16x128xf32, #tpu.memory_space<vmem>>, vector<16x128xf32>
    %c0_2 = arith.constant 0 : index
    %c0_3 = arith.constant 0 : index
    %4 = vector.load %arg2[%c0_2, %c0_3] : memref<16x128xbf16, #tpu.memory_space<vmem>>, vector<16x128xbf16>
    %c0_4 = arith.constant 0 : index
    %c0_5 = arith.constant 0 : index
    %5 = vector.load %arg3[%c0_4, %c0_5] : memref<128x128xbf16, #tpu.memory_space<vmem>>, vector<128x128xbf16>
    %cst = arith.constant dense<0.000000e+00> : vector<16x128xf32>
    %6 = tpu.matmul %4, %5, %cst {dimension_numbers = #tpu.dot_dimension_numbers<[1], [0], [0], [1], [0, 0, 1, 1], [], []>} : vector<16x128xbf16>, vector<128x128xbf16>, vector<16x128xf32> -> vector<16x128xf32>
    %7 = arith.addf %3, %6 : vector<16x128xf32>
    %c0_6 = arith.constant 0 : index
    %c0_7 = arith.constant 0 : index
    %8 = vector.load %arg9[%c0_6, %c0_7] : memref<16x128xf32, #tpu.memory_space<vmem>>, vector<16x128xf32>
    tpu.vector_store %arg9[%c0_6, %c0_7], %7 {strides = array<i32>} : memref<16x128xf32, #tpu.memory_space<vmem>>, vector<16x128xf32>,
    %c0_i32_8 = arith.constant 0 : i32
    %9 = arith.cmpi eq, %arg1, %c0_i32_8 : i32
    %10 = arith.extui %9 : i1 to i32
    %c0_i32_9 = arith.constant 0 : i32
    %11 = arith.cmpi ne, %10, %c0_i32_9 : i32
    scf.if %11 {
      %c0_10 = arith.constant 0 : index
      %c0_11 = arith.constant 0 : index
      %12 = vector.load %arg9[%c0_10, %c0_11] : memref<16x128xf32, #tpu.memory_space<vmem>>, vector<16x128xf32>
      %c0_12 = arith.constant 0 : index
      %c0_13 = arith.constant 0 : index
      %13 = vector.load %arg7[%c0_12, %c0_13] : memref<16x1xf32, #tpu.memory_space<vmem>>, vector<16x1xf32>
      %14 = vector.broadcast %13 : vector<16x1xf32> to vector<16x128xf32>
      %15 = arith.mulf %12, %14 : vector<16x128xf32>
      %c0_14 = arith.constant 0 : index
      %c0_15 = arith.constant 0 : index
      %16 = vector.load %arg4[%c0_14, %c0_15] : memref<16x128xbf16, #tpu.memory_space<vmem>>, vector<16x128xbf16>
      %c0_16 = arith.constant 0 : index
      %c0_17 = arith.constant 0 : index
      %17 = vector.load %arg5[%c0_16, %c0_17] : memref<128x128xbf16, #tpu.memory_space<vmem>>, vector<128x128xbf16>
      %cst_18 = arith.constant dense<0.000000e+00> : vector<16x128xf32>
      %18 = tpu.matmul %16, %17, %cst_18 {dimension_numbers = #tpu.dot_dimension_numbers<[1], [0], [0], [1], [0, 0, 1, 1], [], []>} : vector<16x128xbf16>, vector<128x128xbf16>, vector<16x128xf32> -> vector<16x128xf32>
      %c0_19 = arith.constant 0 : index
      %c0_20 = arith.constant 0 : index
      %19 = vector.load %arg6[%c0_19, %c0_20] : memref<1x128xf32, #tpu.memory_space<vmem>>, vector<1x128xf32>
      %20 = vector.broadcast %19 : vector<1x128xf32> to vector<16x128xf32>
      %21 = arith.addf %18, %20 : vector<16x128xf32>
      %22 = arith.addf %15, %21 : vector<16x128xf32>
      %cst_21 = arith.constant 0.000000e+00 : f32
      %23 = vector.broadcast %cst_21 : f32 to vector<16x128xf32>
      %24 = arith.cmpf oge, %22, %23 : vector<16x128xf32>
      %cst_22 = arith.constant 0.00999999977 : f32
      %25 = vector.broadcast %cst_22 : f32 to vector<16x128xf32>
      %26 = arith.mulf %25, %22 : vector<16x128xf32>
      %27 = arith.select %24, %22, %26 : vector<16x128xi1>, vector<16x128xf32>
      %28 = arith.truncf %27 : vector<16x128xf32> to vector<16x128xbf16>
      %c0_23 = arith.constant 0 : index
      %c0_24 = arith.constant 0 : index
      %29 = vector.load %arg8[%c0_23, %c0_24] : memref<16x128xbf16, #tpu.memory_space<vmem>>, vector<16x128xbf16>
      tpu.vector_store %arg8[%c0_23, %c0_24], %28 {strides = array<i32>} : memref<16x128xbf16, #tpu.memory_space<vmem>>, vector<16x128xbf16>,
    } else {
    }
    return
  }
  func.func @transform_0(%arg0: i32, %arg1: i32) -> (i32, i32) {
    %c0_i32 = arith.constant 0 : i32
    return %arg0, %arg1 : i32, i32
  }
  func.func @transform_1(%arg0: i32, %arg1: i32) -> (i32, i32) {
    %c0_i32 = arith.constant 0 : i32
    %c0_i32_0 = arith.constant 0 : i32
    return %arg1, %c0_i32 : i32, i32
  }
  func.func @transform_2(%arg0: i32, %arg1: i32) -> (i32, i32) {
    %c0_i32 = arith.constant 0 : i32
    %c0_i32_0 = arith.constant 0 : i32
    return %arg0, %c0_i32 : i32, i32
  }
  func.func @transform_3(%arg0: i32, %arg1: i32) -> (i32, i32) {
    %c0_i32 = arith.constant 0 : i32
    %c0_i32_0 = arith.constant 0 : i32
    %c0_i32_1 = arith.constant 0 : i32
    return %c0_i32, %c0_i32_0 : i32, i32
  }
  func.func @transform_4(%arg0: i32, %arg1: i32) -> (i32, i32) {
    %c0_i32 = arith.constant 0 : i32
    %c0_i32_0 = arith.constant 0 : i32
    %c0_i32_1 = arith.constant 0 : i32
    return %c0_i32, %c0_i32_0 : i32, i32
  }
  func.func @transform_5(%arg0: i32, %arg1: i32) -> (i32, i32) {
    %c0_i32 = arith.constant 0 : i32
    %c0_i32_0 = arith.constant 0 : i32
    return %arg0, %c0_i32 : i32, i32
  }
  func.func @transform_6(%arg0: i32, %arg1: i32) -> (i32, i32) {
    %c0_i32 = arith.constant 0 : i32
    %c0_i32_0 = arith.constant 0 : i32
    return %arg0, %c0_i32 : i32, i32
  }
}

module attributes {stable_mosaic.version = 11 : i64} {
  func.func @_linear_kernel(%arg0: i32, %arg1: memref<16x128xbf16, #tpu.memory_space<vmem>>, %arg2: memref<128x128xbf16, #tpu.memory_space<vmem>>, %arg3: memref<16x128xbf16, #tpu.memory_space<vmem>>) attributes {dimension_semantics = [#tpu.dimension_semantics<parallel>], iteration_bounds = array<i64: 2>, scalar_prefetch = 0 : i64, scratch_operands = 0 : i64, tpu.core_type = #tpu.core_type<tc>, window_params = [{transform_indices = @transform_0, window_bounds = array<i64: 16, 128>}, {pipeline_mode = #tpu.pipeline_mode<synchronous>, transform_indices = @transform_1, window_bounds = array<i64: 128, 128>}, {transform_indices = @transform_2, window_bounds = array<i64: 16, 128>}]} {
    %c0 = arith.constant 0 : index
    %c0_0 = arith.constant 0 : index
    %0 = vector.load %arg1[%c0, %c0_0] : memref<16x128xbf16, #tpu.memory_space<vmem>>, vector<16x128xbf16>
    %c0_1 = arith.constant 0 : index
    %c0_2 = arith.constant 0 : index
    %1 = vector.load %arg2[%c0_1, %c0_2] : memref<128x128xbf16, #tpu.memory_space<vmem>>, vector<128x128xbf16>
    %cst = arith.constant dense<0.000000e+00> : vector<16x128xf32>
    %2 = tpu.matmul %0, %1, %cst {dimension_numbers = #tpu.dot_dimension_numbers<[1], [0], [0], [1], [0, 0, 1, 1], [], []>} : vector<16x128xbf16>, vector<128x128xbf16>, vector<16x128xf32> -> vector<16x128xf32>
    %3 = arith.truncf %2 : vector<16x128xf32> to vector<16x128xbf16>
    %c0_3 = arith.constant 0 : index
    %c0_4 = arith.constant 0 : index
    %4 = vector.load %arg3[%c0_3, %c0_4] : memref<16x128xbf16, #tpu.memory_space<vmem>>, vector<16x128xbf16>
    tpu.vector_store %arg3[%c0_3, %c0_4], %3 {strides = array<i32>} : memref<16x128xbf16, #tpu.memory_space<vmem>>, vector<16x128xbf16>,
    return
  }
  func.func @transform_0(%arg0: i32) -> (i32, i32) {
    %c0_i32 = arith.constant 0 : i32
    %c0_i32_0 = arith.constant 0 : i32
    return %arg0, %c0_i32 : i32, i32
  }
  func.func @transform_1(%arg0: i32) -> (i32, i32) {
    %c0_i32 = arith.constant 0 : i32
    %c0_i32_0 = arith.constant 0 : i32
    %c0_i32_1 = arith.constant 0 : i32
    return %c0_i32, %c0_i32_0 : i32, i32
  }
  func.func @transform_2(%arg0: i32) -> (i32, i32) {
    %c0_i32 = arith.constant 0 : i32
    %c0_i32_0 = arith.constant 0 : i32
    return %arg0, %c0_i32 : i32, i32
  }
}

module attributes {stable_mosaic.version = 11 : i64} {
  func.func @_sage_agg_kernel(%arg0: i32, %arg1: i32, %arg2: memref<16x128xbf16, #tpu.memory_space<vmem>>, %arg3: memref<128x128xbf16, #tpu.memory_space<vmem>>, %arg4: memref<16x128xbf16, #tpu.memory_space<vmem>>, %arg5: memref<128x128xbf16, #tpu.memory_space<vmem>>, %arg6: memref<1x128xf32, #tpu.memory_space<vmem>>, %arg7: memref<16x1xf32, #tpu.memory_space<vmem>>, %arg8: memref<16x128xf32, #tpu.memory_space<vmem>>, %arg9: memref<16x128xf32, #tpu.memory_space<vmem>>) attributes {dimension_semantics = [#tpu.dimension_semantics<parallel>, #tpu.dimension_semantics<arbitrary>], iteration_bounds = array<i64: 1, 1>, scalar_prefetch = 0 : i64, scratch_operands = 1 : i64, tpu.core_type = #tpu.core_type<tc>, window_params = [{transform_indices = @transform_0, window_bounds = array<i64: 16, 128>}, {transform_indices = @transform_1, window_bounds = array<i64: 128, 128>}, {transform_indices = @transform_2, window_bounds = array<i64: 16, 128>}, {pipeline_mode = #tpu.pipeline_mode<synchronous>, transform_indices = @transform_3, window_bounds = array<i64: 128, 128>}, {pipeline_mode = #tpu.pipeline_mode<synchronous>, transform_indices = @transform_4, window_bounds = array<i64: 1, 128>}, {transform_indices = @transform_5, window_bounds = array<i64: 16, 1>}, {transform_indices = @transform_6, window_bounds = array<i64: 16, 128>}]} {
    %c0_i32 = arith.constant 0 : i32
    %0 = arith.cmpi eq, %arg1, %c0_i32 : i32
    %1 = arith.extui %0 : i1 to i32
    %c0_i32_0 = arith.constant 0 : i32
    %2 = arith.cmpi ne, %1, %c0_i32_0 : i32
    scf.if %2 {
      %cst_10 = arith.constant 0.000000e+00 : f32
      %12 = vector.broadcast %cst_10 : f32 to vector<16x128xf32>
      %c0_11 = arith.constant 0 : index
      %c0_12 = arith.constant 0 : index
      %13 = vector.load %arg9[%c0_11, %c0_12] : memref<16x128xf32, #tpu.memory_space<vmem>>, vector<16x128xf32>
      tpu.vector_store %arg9[%c0_11, %c0_12], %12 {strides = array<i32>} : memref<16x128xf32, #tpu.memory_space<vmem>>, vector<16x128xf32>,
    } else {
    }
    %c0 = arith.constant 0 : index
    %c0_1 = arith.constant 0 : index
    %3 = vector.load %arg9[%c0, %c0_1] : memref<16x128xf32, #tpu.memory_space<vmem>>, vector<16x128xf32>
    %c0_2 = arith.constant 0 : index
    %c0_3 = arith.constant 0 : index
    %4 = vector.load %arg2[%c0_2, %c0_3] : memref<16x128xbf16, #tpu.memory_space<vmem>>, vector<16x128xbf16>
    %c0_4 = arith.constant 0 : index
    %c0_5 = arith.constant 0 : index
    %5 = vector.load %arg3[%c0_4, %c0_5] : memref<128x128xbf16, #tpu.memory_space<vmem>>, vector<128x128xbf16>
    %cst = arith.constant dense<0.000000e+00> : vector<16x128xf32>
    %6 = tpu.matmul %4, %5, %cst {dimension_numbers = #tpu.dot_dimension_numbers<[1], [0], [0], [1], [0, 0, 1, 1], [], []>} : vector<16x128xbf16>, vector<128x128xbf16>, vector<16x128xf32> -> vector<16x128xf32>
    %7 = arith.addf %3, %6 : vector<16x128xf32>
    %c0_6 = arith.constant 0 : index
    %c0_7 = arith.constant 0 : index
    %8 = vector.load %arg9[%c0_6, %c0_7] : memref<16x128xf32, #tpu.memory_space<vmem>>, vector<16x128xf32>
    tpu.vector_store %arg9[%c0_6, %c0_7], %7 {strides = array<i32>} : memref<16x128xf32, #tpu.memory_space<vmem>>, vector<16x128xf32>,
    %c0_i32_8 = arith.constant 0 : i32
    %9 = arith.cmpi eq, %arg1, %c0_i32_8 : i32
    %10 = arith.extui %9 : i1 to i32
    %c0_i32_9 = arith.constant 0 : i32
    %11 = arith.cmpi ne, %10, %c0_i32_9 : i32
    scf.if %11 {
      %c0_10 = arith.constant 0 : index
      %c0_11 = arith.constant 0 : index
      %12 = vector.load %arg9[%c0_10, %c0_11] : memref<16x128xf32, #tpu.memory_space<vmem>>, vector<16x128xf32>
      %c0_12 = arith.constant 0 : index
      %c0_13 = arith.constant 0 : index
      %13 = vector.load %arg7[%c0_12, %c0_13] : memref<16x1xf32, #tpu.memory_space<vmem>>, vector<16x1xf32>
      %14 = vector.broadcast %13 : vector<16x1xf32> to vector<16x128xf32>
      %15 = arith.mulf %12, %14 : vector<16x128xf32>
      %c0_14 = arith.constant 0 : index
      %c0_15 = arith.constant 0 : index
      %16 = vector.load %arg4[%c0_14, %c0_15] : memref<16x128xbf16, #tpu.memory_space<vmem>>, vector<16x128xbf16>
      %c0_16 = arith.constant 0 : index
      %c0_17 = arith.constant 0 : index
      %17 = vector.load %arg5[%c0_16, %c0_17] : memref<128x128xbf16, #tpu.memory_space<vmem>>, vector<128x128xbf16>
      %cst_18 = arith.constant dense<0.000000e+00> : vector<16x128xf32>
      %18 = tpu.matmul %16, %17, %cst_18 {dimension_numbers = #tpu.dot_dimension_numbers<[1], [0], [0], [1], [0, 0, 1, 1], [], []>} : vector<16x128xbf16>, vector<128x128xbf16>, vector<16x128xf32> -> vector<16x128xf32>
      %c0_19 = arith.constant 0 : index
      %c0_20 = arith.constant 0 : index
      %19 = vector.load %arg6[%c0_19, %c0_20] : memref<1x128xf32, #tpu.memory_space<vmem>>, vector<1x128xf32>
      %20 = vector.broadcast %19 : vector<1x128xf32> to vector<16x128xf32>
      %21 = arith.addf %18, %20 : vector<16x128xf32>
      %22 = arith.addf %15, %21 : vector<16x128xf32>
      %c0_21 = arith.constant 0 : index
      %c0_22 = arith.constant 0 : index
      %23 = vector.load %arg8[%c0_21, %c0_22] : memref<16x128xf32, #tpu.memory_space<vmem>>, vector<16x128xf32>
      tpu.vector_store %arg8[%c0_21, %c0_22], %22 {strides = array<i32>} : memref<16x128xf32, #tpu.memory_space<vmem>>, vector<16x128xf32>,
    } else {
    }
    return
  }
  func.func @transform_0(%arg0: i32, %arg1: i32) -> (i32, i32) {
    %c0_i32 = arith.constant 0 : i32
    return %arg0, %arg1 : i32, i32
  }
  func.func @transform_1(%arg0: i32, %arg1: i32) -> (i32, i32) {
    %c0_i32 = arith.constant 0 : i32
    %c0_i32_0 = arith.constant 0 : i32
    return %arg1, %c0_i32 : i32, i32
  }
  func.func @transform_2(%arg0: i32, %arg1: i32) -> (i32, i32) {
    %c0_i32 = arith.constant 0 : i32
    %c0_i32_0 = arith.constant 0 : i32
    return %arg0, %c0_i32 : i32, i32
  }
  func.func @transform_3(%arg0: i32, %arg1: i32) -> (i32, i32) {
    %c0_i32 = arith.constant 0 : i32
    %c0_i32_0 = arith.constant 0 : i32
    %c0_i32_1 = arith.constant 0 : i32
    return %c0_i32, %c0_i32_0 : i32, i32
  }
  func.func @transform_4(%arg0: i32, %arg1: i32) -> (i32, i32) {
    %c0_i32 = arith.constant 0 : i32
    %c0_i32_0 = arith.constant 0 : i32
    %c0_i32_1 = arith.constant 0 : i32
    return %c0_i32, %c0_i32_0 : i32, i32
  }
  func.func @transform_5(%arg0: i32, %arg1: i32) -> (i32, i32) {
    %c0_i32 = arith.constant 0 : i32
    %c0_i32_0 = arith.constant 0 : i32
    return %arg0, %c0_i32 : i32, i32
  }
  func.func @transform_6(%arg0: i32, %arg1: i32) -> (i32, i32) {
    %c0_i32 = arith.constant 0 : i32
    %c0_i32_0 = arith.constant 0 : i32
    return %arg0, %c0_i32 : i32, i32
  }
}

module attributes {stable_mosaic.version = 11 : i64} {
  func.func @_sage_agg_kernel(%arg0: i32, %arg1: i32, %arg2: memref<16x128xbf16, #tpu.memory_space<vmem>>, %arg3: memref<128x128xbf16, #tpu.memory_space<vmem>>, %arg4: memref<16x128xbf16, #tpu.memory_space<vmem>>, %arg5: memref<128x128xbf16, #tpu.memory_space<vmem>>, %arg6: memref<1x128xf32, #tpu.memory_space<vmem>>, %arg7: memref<16x1xf32, #tpu.memory_space<vmem>>, %arg8: memref<16x128xbf16, #tpu.memory_space<vmem>>, %arg9: memref<16x128xf32, #tpu.memory_space<vmem>>) attributes {dimension_semantics = [#tpu.dimension_semantics<parallel>, #tpu.dimension_semantics<arbitrary>], iteration_bounds = array<i64: 1, 1>, scalar_prefetch = 0 : i64, scratch_operands = 1 : i64, tpu.core_type = #tpu.core_type<tc>, window_params = [{transform_indices = @transform_0, window_bounds = array<i64: 16, 128>}, {transform_indices = @transform_1, window_bounds = array<i64: 128, 128>}, {transform_indices = @transform_2, window_bounds = array<i64: 16, 128>}, {pipeline_mode = #tpu.pipeline_mode<synchronous>, transform_indices = @transform_3, window_bounds = array<i64: 128, 128>}, {pipeline_mode = #tpu.pipeline_mode<synchronous>, transform_indices = @transform_4, window_bounds = array<i64: 1, 128>}, {transform_indices = @transform_5, window_bounds = array<i64: 16, 1>}, {transform_indices = @transform_6, window_bounds = array<i64: 16, 128>}]} {
    %c0_i32 = arith.constant 0 : i32
    %0 = arith.cmpi eq, %arg1, %c0_i32 : i32
    %1 = arith.extui %0 : i1 to i32
    %c0_i32_0 = arith.constant 0 : i32
    %2 = arith.cmpi ne, %1, %c0_i32_0 : i32
    scf.if %2 {
      %cst_10 = arith.constant 0.000000e+00 : f32
      %12 = vector.broadcast %cst_10 : f32 to vector<16x128xf32>
      %c0_11 = arith.constant 0 : index
      %c0_12 = arith.constant 0 : index
      %13 = vector.load %arg9[%c0_11, %c0_12] : memref<16x128xf32, #tpu.memory_space<vmem>>, vector<16x128xf32>
      tpu.vector_store %arg9[%c0_11, %c0_12], %12 {strides = array<i32>} : memref<16x128xf32, #tpu.memory_space<vmem>>, vector<16x128xf32>,
    } else {
    }
    %c0 = arith.constant 0 : index
    %c0_1 = arith.constant 0 : index
    %3 = vector.load %arg9[%c0, %c0_1] : memref<16x128xf32, #tpu.memory_space<vmem>>, vector<16x128xf32>
    %c0_2 = arith.constant 0 : index
    %c0_3 = arith.constant 0 : index
    %4 = vector.load %arg2[%c0_2, %c0_3] : memref<16x128xbf16, #tpu.memory_space<vmem>>, vector<16x128xbf16>
    %c0_4 = arith.constant 0 : index
    %c0_5 = arith.constant 0 : index
    %5 = vector.load %arg3[%c0_4, %c0_5] : memref<128x128xbf16, #tpu.memory_space<vmem>>, vector<128x128xbf16>
    %cst = arith.constant dense<0.000000e+00> : vector<16x128xf32>
    %6 = tpu.matmul %4, %5, %cst {dimension_numbers = #tpu.dot_dimension_numbers<[1], [0], [0], [1], [0, 0, 1, 1], [], []>} : vector<16x128xbf16>, vector<128x128xbf16>, vector<16x128xf32> -> vector<16x128xf32>
    %7 = arith.addf %3, %6 : vector<16x128xf32>
    %c0_6 = arith.constant 0 : index
    %c0_7 = arith.constant 0 : index
    %8 = vector.load %arg9[%c0_6, %c0_7] : memref<16x128xf32, #tpu.memory_space<vmem>>, vector<16x128xf32>
    tpu.vector_store %arg9[%c0_6, %c0_7], %7 {strides = array<i32>} : memref<16x128xf32, #tpu.memory_space<vmem>>, vector<16x128xf32>,
    %c0_i32_8 = arith.constant 0 : i32
    %9 = arith.cmpi eq, %arg1, %c0_i32_8 : i32
    %10 = arith.extui %9 : i1 to i32
    %c0_i32_9 = arith.constant 0 : i32
    %11 = arith.cmpi ne, %10, %c0_i32_9 : i32
    scf.if %11 {
      %c0_10 = arith.constant 0 : index
      %c0_11 = arith.constant 0 : index
      %12 = vector.load %arg9[%c0_10, %c0_11] : memref<16x128xf32, #tpu.memory_space<vmem>>, vector<16x128xf32>
      %c0_12 = arith.constant 0 : index
      %c0_13 = arith.constant 0 : index
      %13 = vector.load %arg7[%c0_12, %c0_13] : memref<16x1xf32, #tpu.memory_space<vmem>>, vector<16x1xf32>
      %14 = vector.broadcast %13 : vector<16x1xf32> to vector<16x128xf32>
      %15 = arith.mulf %12, %14 : vector<16x128xf32>
      %c0_14 = arith.constant 0 : index
      %c0_15 = arith.constant 0 : index
      %16 = vector.load %arg4[%c0_14, %c0_15] : memref<16x128xbf16, #tpu.memory_space<vmem>>, vector<16x128xbf16>
      %c0_16 = arith.constant 0 : index
      %c0_17 = arith.constant 0 : index
      %17 = vector.load %arg5[%c0_16, %c0_17] : memref<128x128xbf16, #tpu.memory_space<vmem>>, vector<128x128xbf16>
      %cst_18 = arith.constant dense<0.000000e+00> : vector<16x128xf32>
      %18 = tpu.matmul %16, %17, %cst_18 {dimension_numbers = #tpu.dot_dimension_numbers<[1], [0], [0], [1], [0, 0, 1, 1], [], []>} : vector<16x128xbf16>, vector<128x128xbf16>, vector<16x128xf32> -> vector<16x128xf32>
      %c0_19 = arith.constant 0 : index
      %c0_20 = arith.constant 0 : index
      %19 = vector.load %arg6[%c0_19, %c0_20] : memref<1x128xf32, #tpu.memory_space<vmem>>, vector<1x128xf32>
      %20 = vector.broadcast %19 : vector<1x128xf32> to vector<16x128xf32>
      %21 = arith.addf %18, %20 : vector<16x128xf32>
      %22 = arith.addf %15, %21 : vector<16x128xf32>
      %cst_21 = arith.constant 0.000000e+00 : f32
      %23 = vector.broadcast %cst_21 : f32 to vector<16x128xf32>
      %24 = arith.cmpf oge, %22, %23 : vector<16x128xf32>
      %cst_22 = arith.constant 0.00999999977 : f32
      %25 = vector.broadcast %cst_22 : f32 to vector<16x128xf32>
      %26 = arith.mulf %25, %22 : vector<16x128xf32>
      %27 = arith.select %24, %22, %26 : vector<16x128xi1>, vector<16x128xf32>
      %28 = arith.truncf %27 : vector<16x128xf32> to vector<16x128xbf16>
      %c0_23 = arith.constant 0 : index
      %c0_24 = arith.constant 0 : index
      %29 = vector.load %arg8[%c0_23, %c0_24] : memref<16x128xbf16, #tpu.memory_space<vmem>>, vector<16x128xbf16>
      tpu.vector_store %arg8[%c0_23, %c0_24], %28 {strides = array<i32>} : memref<16x128xbf16, #tpu.memory_space<vmem>>, vector<16x128xbf16>,
    } else {
    }
    return
  }
  func.func @transform_0(%arg0: i32, %arg1: i32) -> (i32, i32) {
    %c0_i32 = arith.constant 0 : i32
    return %arg0, %arg1 : i32, i32
  }
  func.func @transform_1(%arg0: i32, %arg1: i32) -> (i32, i32) {
    %c0_i32 = arith.constant 0 : i32
    %c0_i32_0 = arith.constant 0 : i32
    return %arg1, %c0_i32 : i32, i32
  }
  func.func @transform_2(%arg0: i32, %arg1: i32) -> (i32, i32) {
    %c0_i32 = arith.constant 0 : i32
    %c0_i32_0 = arith.constant 0 : i32
    return %arg0, %c0_i32 : i32, i32
  }
  func.func @transform_3(%arg0: i32, %arg1: i32) -> (i32, i32) {
    %c0_i32 = arith.constant 0 : i32
    %c0_i32_0 = arith.constant 0 : i32
    %c0_i32_1 = arith.constant 0 : i32
    return %c0_i32, %c0_i32_0 : i32, i32
  }
  func.func @transform_4(%arg0: i32, %arg1: i32) -> (i32, i32) {
    %c0_i32 = arith.constant 0 : i32
    %c0_i32_0 = arith.constant 0 : i32
    %c0_i32_1 = arith.constant 0 : i32
    return %c0_i32, %c0_i32_0 : i32, i32
  }
  func.func @transform_5(%arg0: i32, %arg1: i32) -> (i32, i32) {
    %c0_i32 = arith.constant 0 : i32
    %c0_i32_0 = arith.constant 0 : i32
    return %arg0, %c0_i32 : i32, i32
  }
  func.func @transform_6(%arg0: i32, %arg1: i32) -> (i32, i32) {
    %c0_i32 = arith.constant 0 : i32
    %c0_i32_0 = arith.constant 0 : i32
    return %arg0, %c0_i32 : i32, i32
  }
}

module attributes {stable_mosaic.version = 11 : i64} {
  func.func @_sage_agg_kernel(%arg0: i32, %arg1: i32, %arg2: memref<16x128xbf16, #tpu.memory_space<vmem>>, %arg3: memref<128x128xbf16, #tpu.memory_space<vmem>>, %arg4: memref<16x128xbf16, #tpu.memory_space<vmem>>, %arg5: memref<128x128xbf16, #tpu.memory_space<vmem>>, %arg6: memref<1x128xf32, #tpu.memory_space<vmem>>, %arg7: memref<16x1xf32, #tpu.memory_space<vmem>>, %arg8: memref<16x128xf32, #tpu.memory_space<vmem>>, %arg9: memref<16x128xf32, #tpu.memory_space<vmem>>) attributes {dimension_semantics = [#tpu.dimension_semantics<parallel>, #tpu.dimension_semantics<arbitrary>], iteration_bounds = array<i64: 2, 1>, scalar_prefetch = 0 : i64, scratch_operands = 1 : i64, tpu.core_type = #tpu.core_type<tc>, window_params = [{transform_indices = @transform_0, window_bounds = array<i64: 16, 128>}, {transform_indices = @transform_1, window_bounds = array<i64: 128, 128>}, {transform_indices = @transform_2, window_bounds = array<i64: 16, 128>}, {pipeline_mode = #tpu.pipeline_mode<synchronous>, transform_indices = @transform_3, window_bounds = array<i64: 128, 128>}, {pipeline_mode = #tpu.pipeline_mode<synchronous>, transform_indices = @transform_4, window_bounds = array<i64: 1, 128>}, {transform_indices = @transform_5, window_bounds = array<i64: 16, 1>}, {transform_indices = @transform_6, window_bounds = array<i64: 16, 128>}]} {
    %c0_i32 = arith.constant 0 : i32
    %0 = arith.cmpi eq, %arg1, %c0_i32 : i32
    %1 = arith.extui %0 : i1 to i32
    %c0_i32_0 = arith.constant 0 : i32
    %2 = arith.cmpi ne, %1, %c0_i32_0 : i32
    scf.if %2 {
      %cst_10 = arith.constant 0.000000e+00 : f32
      %12 = vector.broadcast %cst_10 : f32 to vector<16x128xf32>
      %c0_11 = arith.constant 0 : index
      %c0_12 = arith.constant 0 : index
      %13 = vector.load %arg9[%c0_11, %c0_12] : memref<16x128xf32, #tpu.memory_space<vmem>>, vector<16x128xf32>
      tpu.vector_store %arg9[%c0_11, %c0_12], %12 {strides = array<i32>} : memref<16x128xf32, #tpu.memory_space<vmem>>, vector<16x128xf32>,
    } else {
    }
    %c0 = arith.constant 0 : index
    %c0_1 = arith.constant 0 : index
    %3 = vector.load %arg9[%c0, %c0_1] : memref<16x128xf32, #tpu.memory_space<vmem>>, vector<16x128xf32>
    %c0_2 = arith.constant 0 : index
    %c0_3 = arith.constant 0 : index
    %4 = vector.load %arg2[%c0_2, %c0_3] : memref<16x128xbf16, #tpu.memory_space<vmem>>, vector<16x128xbf16>
    %c0_4 = arith.constant 0 : index
    %c0_5 = arith.constant 0 : index
    %5 = vector.load %arg3[%c0_4, %c0_5] : memref<128x128xbf16, #tpu.memory_space<vmem>>, vector<128x128xbf16>
    %cst = arith.constant dense<0.000000e+00> : vector<16x128xf32>
    %6 = tpu.matmul %4, %5, %cst {dimension_numbers = #tpu.dot_dimension_numbers<[1], [0], [0], [1], [0, 0, 1, 1], [], []>} : vector<16x128xbf16>, vector<128x128xbf16>, vector<16x128xf32> -> vector<16x128xf32>
    %7 = arith.addf %3, %6 : vector<16x128xf32>
    %c0_6 = arith.constant 0 : index
    %c0_7 = arith.constant 0 : index
    %8 = vector.load %arg9[%c0_6, %c0_7] : memref<16x128xf32, #tpu.memory_space<vmem>>, vector<16x128xf32>
    tpu.vector_store %arg9[%c0_6, %c0_7], %7 {strides = array<i32>} : memref<16x128xf32, #tpu.memory_space<vmem>>, vector<16x128xf32>,
    %c0_i32_8 = arith.constant 0 : i32
    %9 = arith.cmpi eq, %arg1, %c0_i32_8 : i32
    %10 = arith.extui %9 : i1 to i32
    %c0_i32_9 = arith.constant 0 : i32
    %11 = arith.cmpi ne, %10, %c0_i32_9 : i32
    scf.if %11 {
      %c0_10 = arith.constant 0 : index
      %c0_11 = arith.constant 0 : index
      %12 = vector.load %arg9[%c0_10, %c0_11] : memref<16x128xf32, #tpu.memory_space<vmem>>, vector<16x128xf32>
      %c0_12 = arith.constant 0 : index
      %c0_13 = arith.constant 0 : index
      %13 = vector.load %arg7[%c0_12, %c0_13] : memref<16x1xf32, #tpu.memory_space<vmem>>, vector<16x1xf32>
      %14 = vector.broadcast %13 : vector<16x1xf32> to vector<16x128xf32>
      %15 = arith.mulf %12, %14 : vector<16x128xf32>
      %c0_14 = arith.constant 0 : index
      %c0_15 = arith.constant 0 : index
      %16 = vector.load %arg4[%c0_14, %c0_15] : memref<16x128xbf16, #tpu.memory_space<vmem>>, vector<16x128xbf16>
      %c0_16 = arith.constant 0 : index
      %c0_17 = arith.constant 0 : index
      %17 = vector.load %arg5[%c0_16, %c0_17] : memref<128x128xbf16, #tpu.memory_space<vmem>>, vector<128x128xbf16>
      %cst_18 = arith.constant dense<0.000000e+00> : vector<16x128xf32>
      %18 = tpu.matmul %16, %17, %cst_18 {dimension_numbers = #tpu.dot_dimension_numbers<[1], [0], [0], [1], [0, 0, 1, 1], [], []>} : vector<16x128xbf16>, vector<128x128xbf16>, vector<16x128xf32> -> vector<16x128xf32>
      %c0_19 = arith.constant 0 : index
      %c0_20 = arith.constant 0 : index
      %19 = vector.load %arg6[%c0_19, %c0_20] : memref<1x128xf32, #tpu.memory_space<vmem>>, vector<1x128xf32>
      %20 = vector.broadcast %19 : vector<1x128xf32> to vector<16x128xf32>
      %21 = arith.addf %18, %20 : vector<16x128xf32>
      %22 = arith.addf %15, %21 : vector<16x128xf32>
      %c0_21 = arith.constant 0 : index
      %c0_22 = arith.constant 0 : index
      %23 = vector.load %arg8[%c0_21, %c0_22] : memref<16x128xf32, #tpu.memory_space<vmem>>, vector<16x128xf32>
      tpu.vector_store %arg8[%c0_21, %c0_22], %22 {strides = array<i32>} : memref<16x128xf32, #tpu.memory_space<vmem>>, vector<16x128xf32>,
    } else {
    }
    return
  }
  func.func @transform_0(%arg0: i32, %arg1: i32) -> (i32, i32) {
    %c0_i32 = arith.constant 0 : i32
    return %arg0, %arg1 : i32, i32
  }
  func.func @transform_1(%arg0: i32, %arg1: i32) -> (i32, i32) {
    %c0_i32 = arith.constant 0 : i32
    %c0_i32_0 = arith.constant 0 : i32
    return %arg1, %c0_i32 : i32, i32
  }
  func.func @transform_2(%arg0: i32, %arg1: i32) -> (i32, i32) {
    %c0_i32 = arith.constant 0 : i32
    %c0_i32_0 = arith.constant 0 : i32
    return %arg0, %c0_i32 : i32, i32
  }
  func.func @transform_3(%arg0: i32, %arg1: i32) -> (i32, i32) {
    %c0_i32 = arith.constant 0 : i32
    %c0_i32_0 = arith.constant 0 : i32
    %c0_i32_1 = arith.constant 0 : i32
    return %c0_i32, %c0_i32_0 : i32, i32
  }
  func.func @transform_4(%arg0: i32, %arg1: i32) -> (i32, i32) {
    %c0_i32 = arith.constant 0 : i32
    %c0_i32_0 = arith.constant 0 : i32
    %c0_i32_1 = arith.constant 0 : i32
    return %c0_i32, %c0_i32_0 : i32, i32
  }
  func.func @transform_5(%arg0: i32, %arg1: i32) -> (i32, i32) {
    %c0_i32 = arith.constant 0 : i32
    %c0_i32_0 = arith.constant 0 : i32
    return %arg0, %c0_i32 : i32, i32
  }
  func.func @transform_6(%arg0: i32, %arg1: i32) -> (i32, i32) {
    %c0_i32 = arith.constant 0 : i32
    %c0_i32_0 = arith.constant 0 : i32
    return %arg0, %c0_i32 : i32, i32
  }
}

</mosaic_0001>

<llo_original>
// kernel: gnn_sage_forward.8
$region0: #{gnn_sage_forward.8}
  #allocation0 [shape = 'u32[]', space=smem, size = 0x4, offset = 0x4, fixed_abs, tag = 'smem constant byte address 0x4 - core index']
  #allocation1 [shape = 'u32[144,128]{1,0:T(1,128)}', space=vmem, size = 0x12000, scoped, tag = 'internal scratch']
  %s0 = inlined_call_operand.vmem [shape: bf16[16,128], index: 0, kind: input, shape index: {}]
  %s1 = inlined_call_operand.vmem [shape: bf16[128,128], index: 1, kind: input, shape index: {}]
  %s2 = inlined_call_operand.vmem [shape: bf16[16,128], index: 2, kind: output, shape index: {}]
  %s3 = sld [smem:[#allocation0]]
  $region18: #{gnn_sage_forward.8} parent=0
    _
  %s5 = ssub.s32 1, %s3
  %s6 = scalar_select 0, %s5, %s3
  // Predicated region
  $region2: #{gnn_sage_forward.8} parent=0 // pred_check
    _
  $region3: #{gnn_sage_forward.8} parent=0 // pred_check_branch
    %8 = sbr.rel (0) target = $region5
  $region4: #{gnn_sage_forward.8} parent=0 // pred_region
    _
  $region5: #{gnn_sage_forward.8} parent=0 // pred_fallthru
    _
  // Predicated region
  $region6: #{gnn_sage_forward.8} parent=0 // pred_check
    _
  $region7: #{gnn_sage_forward.8} parent=0 // pred_check_branch
    %10 = sbr.rel (0) target = $region9
  $region8: #{gnn_sage_forward.8} parent=0 // pred_region
    _
  $region9: #{gnn_sage_forward.8} parent=0 // pred_fallthru
    _
  %v12 = vld [vmem:[%s0] sm:$0xf]
  %v13 = vld [vmem:[%s0 + $0x4] sm:$0xf]
  %v14 = vld [vmem:[%s1] sm:$0xf]
  %v15 = vld [vmem:[%s1 + $0x4] sm:$0xf]
  %v16 = vld [vmem:[%s1 + $0x8] sm:$0xf]
  %v17 = vld [vmem:[%s1 + $0xc] sm:$0xf]
  %v18 = vld [vmem:[%s1 + $0x10] sm:$0xf]
  %v19 = vld [vmem:[%s1 + $0x14] sm:$0xf]
  %v20 = vld [vmem:[%s1 + $0x18] sm:$0xf]
  %v21 = vld [vmem:[%s1 + $0x1c] sm:$0xf]
  %v22 = vld [vmem:[%s1 + $0x20] sm:$0xf]
  %v23 = vld [vmem:[%s1 + $0x24] sm:$0xf]
  %v24 = vld [vmem:[%s1 + $0x28] sm:$0xf]
  %v25 = vld [vmem:[%s1 + $0x2c] sm:$0xf]
  %v26 = vld [vmem:[%s1 + $0x30] sm:$0xf]
  %v27 = vld [vmem:[%s1 + $0x34] sm:$0xf]
  %v28 = vld [vmem:[%s1 + $0x38] sm:$0xf]
  %v29 = vld [vmem:[%s1 + $0x3c] sm:$0xf]
  %v32 = vunpack.c.l.b16 %v12
  %v33 = vunpack.c.l.b16 %v13
  %v34 = vpack.c.b16 %v33, %v32
  %v52 = vunpack.c.l.b16 %v14
  %v53 = vunpack.c.l.b16 %v15
  %v54 = vunpack.c.l.b16 %v16
  %v55 = vunpack.c.l.b16 %v17
  %v56 = vunpack.c.l.b16 %v18
  %v57 = vunpack.c.l.b16 %v19
  %v58 = vunpack.c.l.b16 %v20
  %v59 = vunpack.c.l.b16 %v21
  %v60 = vunpack.c.l.b16 %v22
  %v61 = vunpack.c.l.b16 %v23
  %v62 = vunpack.c.l.b16 %v24
  %v63 = vunpack.c.l.b16 %v25
  %v64 = vunpack.c.l.b16 %v26
  %v65 = vunpack.c.l.b16 %v27
  %v66 = vunpack.c.l.b16 %v28
  %v67 = vunpack.c.l.b16 %v29
  %v68 = vpack.c.b16 %v53, %v52
  %v69 = vpack.c.b16 %v55, %v54
  %v70 = vpack.c.b16 %v57, %v56
  %v71 = vpack.c.b16 %v59, %v58
  %v72 = vpack.c.b16 %v61, %v60
  %v73 = vpack.c.b16 %v63, %v62
  %v74 = vpack.c.b16 %v65, %v64
  %v75 = vpack.c.b16 %v67, %v66
  %84 = vmatprep.subr.bf16.mxu0 0
  %85 = vmatpush1.bf16.msra.mxu0 %v68
  %86 = vmatprep.subr.bf16.mxu0 0
  %87 = vmatpush1.bf16.msra.mxu0 %v69
  %88 = vmatprep.subr.bf16.mxu0 0
  %89 = vmatpush1.bf16.msra.mxu0 %v70
  %90 = vmatprep.subr.bf16.mxu0 0
  %91 = vmatpush1.bf16.msra.mxu0 %v71
  %92 = vmatprep.subr.bf16.mxu0 0
  %93 = vmatpush1.bf16.msra.mxu0 %v72
  %94 = vmatprep.subr.bf16.mxu0 0
  %95 = vmatpush1.bf16.msra.mxu0 %v73
  %96 = vmatprep.subr.bf16.mxu0 0
  %97 = vmatpush1.bf16.msra.mxu0 %v74
  %98 = vmatprep.subr.bf16.mxu0 0
  %99 = vmatpush1.bf16.msra.mxu0 %v75
  %100 = vmatprep.subr.bf16.mxu0 0
  %101 = vmatpush1.bf16.msra.mxu0 0
  %102 = vmatprep.subr.bf16.mxu0 0
  %103 = vmatpush1.bf16.msra.mxu0 0
  %104 = vmatprep.subr.bf16.mxu0 0
  %105 = vmatpush1.bf16.msra.mxu0 0
  %106 = vmatprep.subr.bf16.mxu0 0
  %107 = vmatpush1.bf16.msra.mxu0 0
  %108 = vmatprep.subr.bf16.mxu0 0
  %109 = vmatpush1.bf16.msra.mxu0 0
  %110 = vmatprep.subr.bf16.mxu0 0
  %111 = vmatpush1.bf16.msra.mxu0 0
  %112 = vmatprep.subr.bf16.mxu0 0
  %113 = vmatpush1.bf16.msra.mxu0 0
  %114 = vmatprep.subr.bf16.mxu0 0
  %115 = vmatpush1.bf16.msra.mxu0 0
  %116 = vmatprep.mubr.bf16.mxu0 0
  %117 = vmatmul.mubr.bf16.gmra.mrb[0].mxu0 %v34
  %v118 = vpop.f32.mrb[0].mxu0
  %v119 = vadd.f32 0.0, %v118
  %v120 = vpop.f32.mrb[0].mxu0
  %v121 = vpop.f32.mrb[0].mxu0
  %v122 = vadd.f32 0.0, %v121
  %v123 = vpop.f32.mrb[0].mxu0
  %124 = vdwg.mxu0
  %v125 = vpack.c.bf16 %v122, %v119
  %v127 = vunpack.c.l.b16 %v125
  %v128 = vunpack.c.h.b16 %v125
  %v129 = vpack.c.b16 %v127, %v127
  %v130 = vpack.c.b16 %v128, %v128
  %133 = vst [vmem:[%s2] sm:$0xf] %v129
  %134 = vst [vmem:[%s2 + $0x4] sm:$0xf] %v130
  // Predicated region
  $region10: #{gnn_sage_forward.8} parent=0 // pred_check
    _
  $region11: #{gnn_sage_forward.8} parent=0 // pred_check_branch
    %136 = sbr.rel (0) target = $region13
  $region12: #{gnn_sage_forward.8} parent=0 // pred_region
    _
  $region13: #{gnn_sage_forward.8} parent=0 // pred_fallthru
    _
  // Predicated region
  $region14: #{gnn_sage_forward.8} parent=0 // pred_check
    _
  $region15: #{gnn_sage_forward.8} parent=0 // pred_check_branch
    %138 = sbr.rel (0) target = $region17
  $region16: #{gnn_sage_forward.8} parent=0 // pred_region
    _
  $region17: #{gnn_sage_forward.8} parent=0 // pred_fallthru
    _

// kernel: gnn_sage_forward.13
$region0: #{gnn_sage_forward.13}
  #allocation0 [shape = 'u32[]', space=smem, size = 0x4, offset = 0x4, fixed_abs, tag = 'smem constant byte address 0x4 - core index']
  #allocation1 [shape = 'u32[144,128]{1,0:T(1,128)}', space=vmem, size = 0x12000, scoped, tag = 'internal scratch']
  %s0 = inlined_call_operand.vmem [shape: bf16[32,128], index: 0, kind: input, shape index: {}]
  %s1 = inlined_call_operand.vmem [shape: bf16[128,128], index: 1, kind: input, shape index: {}]
  %s2 = inlined_call_operand.vmem [shape: bf16[32,128], index: 2, kind: output, shape index: {}]
  %s3 = sld [smem:[#allocation0]]
  $region41: #{gnn_sage_forward.13} parent=0
    _
  %s5 = ssub.s32 1, %s3
  %s6 = scalar_select 0, %s5, %s3
  loop: start=0, step=1, limit=4
  $region2: #{gnn_sage_forward.13} parent=0 // loop_pre_header
    _
  $region3: #{gnn_sage_forward.13} parent=0 // loop_header
    %s8 = sphi 0, %s12
    %p9 = scmp.ge.s32.totalorder %s8, 4
    %s18 = sphi 0, %s20
    %s21 = sphi 0, %s18
    %s22 = sphi 0, %s21
    %s38 = sphi 0, %s22
    %s42 = sphi 0, %s42
    %s44 = sphi 0, %s42
    %s45 = sphi 0, %s44
    %s59 = sphi 0, %s45
    %s65 = sphi 0, %s67
    %s68 = sphi 0, %s65
    %s69 = sphi 0, %s68
    %s85 = sphi 0, %s69
  $region4: #{gnn_sage_forward.13} parent=0 // loop_header_branch
    %11 = sbr.rel (%p9) target = $region8
  $region5: #{gnn_sage_forward.13} parent=0 // loop_body
    %s13 = ssub.s32 %s8, 1
    %s14 = ssub.s32 %s8, 2
    %s15 = sadd.s32 %s8, 1
    %s16 = ssub.s32 %s8, %s15
    %p17 = scmp.eq.s32.totalorder %s16, 0
    %s19 = sadd.s32 %s18, 1
    %s20 = scalar_select %p17, %s18, %s19
    %p23 = pneg %p17
    %p24 = scmp.eq.s32.totalorder %s8, 1
    %p25 = por %p23, %p24
    %p26 = scmp.ne.s32.totalorder %s18, %s21
    %p27 = scmp.eq.s32.totalorder %s8, 0
    %p28 = por %p26, %p27
    %p29 = scmp.ne.s32.totalorder %s18, %s21
    %p30 = scmp.eq.s32.totalorder %s13, 1
    %p31 = por %p29, %p30
    %p32 = scmp.ne.s32.totalorder %s21, %s22
    %p33 = scmp.eq.s32.totalorder %s13, 0
    %p34 = por %p32, %p33
    %p35 = scmp.ne.s32.totalorder %s21, %s22
    %p36 = scmp.eq.s32.totalorder %s14, 1
    %p37 = por %p35, %p36
    %p39 = scmp.ne.s32.totalorder %s22, %s38
    %p40 = scmp.eq.s32.totalorder %s14, 0
    %p41 = por %p39, %p40
    %s43 = sadd.s32 %s42, 1
    %p46 = scmp.eq.s32.totalorder %s8, 1
    %p47 = scmp.ne.s32.totalorder %s42, %s44
    %p48 = scmp.eq.s32.totalorder %s8, 0
    %p49 = por %p47, %p48
    %p50 = scmp.ne.s32.totalorder %s42, %s44
    %p51 = scmp.eq.s32.totalorder %s13, 1
    %p52 = por %p50, %p51
    %p53 = scmp.ne.s32.totalorder %s44, %s45
    %p54 = scmp.eq.s32.totalorder %s13, 0
    %p55 = por %p53, %p54
    %p56 = scmp.ne.s32.totalorder %s44, %s45
    %p57 = scmp.eq.s32.totalorder %s14, 1
    %p58 = por %p56, %p57
    %p60 = scmp.ne.s32.totalorder %s45, %s59
    %p61 = scmp.eq.s32.totalorder %s14, 0
    %p62 = por %p60, %p61
    %s63 = ssub.s32 %s8, %s15
    %p64 = scmp.eq.s32.totalorder %s63, 0
    %s66 = sadd.s32 %s65, 1
    %s67 = scalar_select %p64, %s65, %s66
    %p70 = pneg %p64
    %p71 = scmp.eq.s32.totalorder %s8, 1
    %p72 = por %p70, %p71
    %p73 = scmp.ne.s32.totalorder %s65, %s68
    %p74 = scmp.eq.s32.totalorder %s8, 0
    %p75 = por %p73, %p74
    %p76 = scmp.ne.s32.totalorder %s65, %s68
    %p77 = scmp.eq.s32.totalorder %s13, 1
    %p78 = por %p76, %p77
    %p79 = scmp.ne.s32.totalorder %s68, %s69
    %p80 = scmp.eq.s32.totalorder %s13, 0
    %p81 = por %p79, %p80
    %p82 = scmp.ne.s32.totalorder %s68, %s69
    %p83 = scmp.eq.s32.totalorder %s14, 1
    %p84 = por %p82, %p83
    %p86 = scmp.ne.s32.totalorder %s69, %s85
    %p87 = scmp.eq.s32.totalorder %s14, 0
    %p88 = por %p86, %p87
    %p89 = scmp.le.s32.totalorder 1, %s8
    %p90 = scmp.lt.s32.totalorder %s8, 3
    %p91 = pnand %p89, %p90
    %p92 = pneg %p91
    // Predicated region
    $region9: #{gnn_sage_forward.13} parent=5 // pred_check
      _
    $region10: #{gnn_sage_forward.13} parent=5 // pred_check_branch
      %94 = sbr.rel (%p91) target = $region12
    $region11: #{gnn_sage_forward.13} parent=5 // pred_region
      %s95 = ssub.s32 %s8, 1
      // Predicated region
      $region13: #{gnn_sage_forward.13} parent=11 // pred_check
        %p96 = pneg %p55
      $region14: #{gnn_sage_forward.13} parent=11 // pred_check_branch
        %98 = sbr.rel (%p96) target = $region16
      $region15: #{gnn_sage_forward.13} parent=11 // pred_region
        _
      $region16: #{gnn_sage_forward.13} parent=11 // pred_fallthru
        _
    $region12: #{gnn_sage_forward.13} parent=5 // pred_fallthru
      _
    %p99 = scmp.lt.s32.totalorder %s8, 2
    // Predicated region
    $region17: #{gnn_sage_forward.13} parent=5 // pred_check
      %p100 = pneg %p99
    $region18: #{gnn_sage_forward.13} parent=5 // pred_check_branch
      %102 = sbr.rel (%p100) target = $region20
    $region19: #{gnn_sage_forward.13} parent=5 // pred_region
      // Predicated region
      $region21: #{gnn_sage_forward.13} parent=19 // pred_check
        %p103 = pneg %p28
      $region22: #{gnn_sage_forward.13} parent=19 // pred_check_branch
        %105 = sbr.rel (%p103) target = $region24
      $region23: #{gnn_sage_forward.13} parent=19 // pred_region
        %s106 = smul.u32 2, %s8
        %p107 = scmp.lt.s32.totalorder %s106, 3
        %s108 = scalar_select %p107, %s106, 3
        %s109 = smul.addr %s108, 4
        %s110 = scalar_lea.vmem %s0, %s109
        %s111 = smul.u32 2, %s8
      $region24: #{gnn_sage_forward.13} parent=19 // pred_fallthru
        _
    $region20: #{gnn_sage_forward.13} parent=5 // pred_fallthru
      _
    %p112 = scmp.le.s32.totalorder 1, %s8
    %p113 = scmp.lt.s32.totalorder %s8, 3
    %p114 = pnand %p112, %p113
    %p115 = pneg %p114
    // Predicated region
    $region25: #{gnn_sage_forward.13} parent=5 // pred_check
      _
    $region26: #{gnn_sage_forward.13} parent=5 // pred_check_branch
      %117 = sbr.rel (%p114) target = $region28
    $region27: #{gnn_sage_forward.13} parent=5 // pred_region
      %s118 = ssub.s32 %s8, 1
      %s119 = smul.u32 2, %s13
      %p120 = scmp.lt.s32.totalorder %s119, 3
      %s121 = scalar_select %p120, %s119, 3
      %s122 = smul.addr %s121, 4
      %s123 = scalar_lea.vmem %s0, %s122
      %p124 = pneg %p34
      %p125 = pneg %p31
      %p126 = pneg %p55
      %p127 = pneg %p52
      %p128 = pneg %p81
      %p129 = pneg %p78
      %s130 = smul.u32 2, %s13
      %p131 = scmp.lt.s32.totalorder %s130, 3
      %s132 = scalar_select %p131, %s130, 3
      %s133 = smul.addr %s132, 4
      %s134 = scalar_lea.vmem %s2, %s133
      %s135 = smul.u32 2, %s13
      %p136 = scmp.lt.s32.totalorder %s135, 3
      %s137 = scalar_select %p136, %s135, 3
      %s138 = smul.addr %s137, 4
      %s139 = scalar_lea.vmem %s0, %s138
      %s140 = smul.u32 2, %s13
      %s141 = smul.u32 2, %s13
      %p142 = scmp.lt.s32.totalorder %s141, 3
      %s143 = scalar_select %p142, %s141, 3
      %s144 = smul.addr %s143, 4
      %s145 = scalar_lea.vmem %s2, %s144
      %s146 = smul.u32 2, %s13
      %v148 = vld [vmem:[%s139] sm:$0xf]
      %v149 = vld [vmem:[%s139 + $0x4] sm:$0xf]
      %v150 = vld [vmem:[%s1] sm:$0xf]
      %v151 = vld [vmem:[%s1 + $0x4] sm:$0xf]
      %v152 = vld [vmem:[%s1 + $0x8] sm:$0xf]
      %v153 = vld [vmem:[%s1 + $0xc] sm:$0xf]
      %v154 = vld [vmem:[%s1 + $0x10] sm:$0xf]
      %v155 = vld [vmem:[%s1 + $0x14] sm:$0xf]
      %v156 = vld [vmem:[%s1 + $0x18] sm:$0xf]
      %v157 = vld [vmem:[%s1 + $0x1c] sm:$0xf]
      %v158 = vld [vmem:[%s1 + $0x20] sm:$0xf]
      %v159 = vld [vmem:[%s1 + $0x24] sm:$0xf]
      %v160 = vld [vmem:[%s1 + $0x28] sm:$0xf]
      %v161 = vld [vmem:[%s1 + $0x2c] sm:$0xf]
      %v162 = vld [vmem:[%s1 + $0x30] sm:$0xf]
      %v163 = vld [vmem:[%s1 + $0x34] sm:$0xf]
      %v164 = vld [vmem:[%s1 + $0x38] sm:$0xf]
      %v165 = vld [vmem:[%s1 + $0x3c] sm:$0xf]
      %v168 = vunpack.c.l.b16 %v148
      %v169 = vunpack.c.l.b16 %v149
      %v170 = vpack.c.b16 %v169, %v168
      %v188 = vunpack.c.l.b16 %v150
      %v189 = vunpack.c.l.b16 %v151
      %v190 = vunpack.c.l.b16 %v152
      %v191 = vunpack.c.l.b16 %v153
      %v192 = vunpack.c.l.b16 %v154
      %v193 = vunpack.c.l.b16 %v155
      %v194 = vunpack.c.l.b16 %v156
      %v195 = vunpack.c.l.b16 %v157
      %v196 = vunpack.c.l.b16 %v158
      %v197 = vunpack.c.l.b16 %v159
      %v198 = vunpack.c.l.b16 %v160
      %v199 = vunpack.c.l.b16 %v161
      %v200 = vunpack.c.l.b16 %v162
      %v201 = vunpack.c.l.b16 %v163
      %v202 = vunpack.c.l.b16 %v164
      %v203 = vunpack.c.l.b16 %v165
      %v204 = vpack.c.b16 %v189, %v188
      %v205 = vpack.c.b16 %v191, %v190
      %v206 = vpack.c.b16 %v193, %v192
      %v207 = vpack.c.b16 %v195, %v194
      %v208 = vpack.c.b16 %v197, %v196
      %v209 = vpack.c.b16 %v199, %v198
      %v210 = vpack.c.b16 %v201, %v200
      %v211 = vpack.c.b16 %v203, %v202
      %220 = vmatprep.subr.bf16.mxu0 0
      %221 = vmatpush1.bf16.msra.mxu0 %v204
      %222 = vmatprep.subr.bf16.mxu0 0
      %223 = vmatpush1.bf16.msra.mxu0 %v205
      %224 = vmatprep.subr.bf16.mxu0 0
      %225 = vmatpush1.bf16.msra.mxu0 %v206
      %226 = vmatprep.subr.bf16.mxu0 0
      %227 = vmatpush1.bf16.msra.mxu0 %v207
      %228 = vmatprep.subr.bf16.mxu0 0
      %229 = vmatpush1.bf16.msra.mxu0 %v208
      %230 = vmatprep.subr.bf16.mxu0 0
      %231 = vmatpush1.bf16.msra.mxu0 %v209
      %232 = vmatprep.subr.bf16.mxu0 0
      %233 = vmatpush1.bf16.msra.mxu0 %v210
      %234 = vmatprep.subr.bf16.mxu0 0
      %235 = vmatpush1.bf16.msra.mxu0 %v211
      %236 = vmatprep.subr.bf16.mxu0 0
      %237 = vmatpush1.bf16.msra.mxu0 0
      %238 = vmatprep.subr.bf16.mxu0 0
      %239 = vmatpush1.bf16.msra.mxu0 0
      %240 = vmatprep.subr.bf16.mxu0 0
      %241 = vmatpush1.bf16.msra.mxu0 0
      %242 = vmatprep.subr.bf16.mxu0 0
      %243 = vmatpush1.bf16.msra.mxu0 0
      %244 = vmatprep.subr.bf16.mxu0 0
      %245 = vmatpush1.bf16.msra.mxu0 0
      %246 = vmatprep.subr.bf16.mxu0 0
      %247 = vmatpush1.bf16.msra.mxu0 0
      %248 = vmatprep.subr.bf16.mxu0 0
      %249 = vmatpush1.bf16.msra.mxu0 0
      %250 = vmatprep.subr.bf16.mxu0 0
      %251 = vmatpush1.bf16.msra.mxu0 0
      %252 = vmatprep.mubr.bf16.mxu0 0
      %253 = vmatmul.mubr.bf16.gmra.mrb[0].mxu0 %v170
      %v254 = vpop.f32.mrb[0].mxu0
      %v255 = vadd.f32 0.0, %v254
      %v256 = vpop.f32.mrb[0].mxu0
      %v257 = vpop.f32.mrb[0].mxu0
      %v258 = vadd.f32 0.0, %v257
      %v259 = vpop.f32.mrb[0].mxu0
      %260 = vdwg.mxu0
      %v261 = vpack.c.bf16 %v258, %v255
      %v263 = vunpack.c.l.b16 %v261
      %v264 = vunpack.c.h.b16 %v261
      %v265 = vpack.c.b16 %v263, %v263
      %v266 = vpack.c.b16 %v264, %v264
      %269 = vst [vmem:[%s145] sm:$0xf] %v265
      %270 = vst [vmem:[%s145 + $0x4] sm:$0xf] %v266
      %s271 = smul.u32 2, %s13
      %p272 = scmp.lt.s32.totalorder %s271, 3
      %s273 = scalar_select %p272, %s271, 3
      %s274 = smul.addr %s273, 4
      %s275 = scalar_lea.vmem %s2, %s274
      // Predicated region
      $region29: #{gnn_sage_forward.13} parent=27 // pred_check
        %p276 = pneg %p78
      $region30: #{gnn_sage_forward.13} parent=27 // pred_check_branch
        %278 = sbr.rel (%p276) target = $region32
      $region31: #{gnn_sage_forward.13} parent=27 // pred_region
        %s279 = smul.u32 2, %s13
      $region32: #{gnn_sage_forward.13} parent=27 // pred_fallthru
        _
    $region28: #{gnn_sage_forward.13} parent=5 // pred_fallthru
      _
    %p280 = scmp.le.s32.totalorder 2, %s8
    // Predicated region
    $region33: #{gnn_sage_forward.13} parent=5 // pred_check
      %p281 = pneg %p280
    $region34: #{gnn_sage_forward.13} parent=5 // pred_check_branch
      %283 = sbr.rel (%p281) target = $region36
    $region35: #{gnn_sage_forward.13} parent=5 // pred_region
      %s284 = ssub.s32 %s8, 2
      // Predicated region
      $region37: #{gnn_sage_forward.13} parent=35 // pred_check
        %p285 = pneg %p84
      $region38: #{gnn_sage_forward.13} parent=35 // pred_check_branch
        %287 = sbr.rel (%p285) target = $region40
      $region39: #{gnn_sage_forward.13} parent=35 // pred_region
        %s288 = smul.u32 2, %s14
        %p289 = scmp.lt.s32.totalorder %s288, 3
        %s290 = scalar_select %p289, %s288, 3
        %s291 = smul.addr %s290, 4
        %s292 = scalar_lea.vmem %s2, %s291
      $region40: #{gnn_sage_forward.13} parent=35 // pred_fallthru
        _
    $region36: #{gnn_sage_forward.13} parent=5 // pred_fallthru
      _
  $region6: #{gnn_sage_forward.13} parent=0 // loop_footer
    %s12 = sadd.s32 1, %s8
  $region7: #{gnn_sage_forward.13} parent=0 // loop_footer_branch
    %7 = sbr.rel target = $region3
  $region8: #{gnn_sage_forward.13} parent=0 // loop_exit
    _

// kernel: gnn_sage_forward.10
$region0: #{gnn_sage_forward.10}
  #allocation0 [shape = 'u32[]', space=smem, size = 0x4, offset = 0x4, fixed_abs, tag = 'smem constant byte address 0x4 - core index']
  #allocation1 [shape = 'u32[144,128]{1,0:T(1,128)}', space=vmem, size = 0x12000, scoped, tag = 'internal scratch']
  #allocation2 [shape = 'f32[16,128]{1,0:T(8,128)}', space=vmem, size = 0x2000, scoped, tag = 'scratch operand']
  %s0 = inlined_call_operand.vmem [shape: bf16[32,128], index: 0, kind: input, shape index: {}]
  %s1 = inlined_call_operand.vmem [shape: bf16[128,128], index: 1, kind: input, shape index: {}]
  %s2 = inlined_call_operand.vmem [shape: bf16[32,128], index: 2, kind: input, shape index: {}]
  %s3 = inlined_call_operand.vmem [shape: bf16[128,128], index: 3, kind: input, shape index: {}]
  %s4 = inlined_call_operand.vmem [shape: f32[1,128], index: 4, kind: input, shape index: {}]
  %s5 = inlined_call_operand.vmem [shape: f32[32,1], index: 5, kind: input, shape index: {}]
  %s6 = inlined_call_operand.vmem [shape: bf16[32,128], index: 6, kind: output, shape index: {}]
  %s7 = sld [smem:[#allocation0]]
  $region65: #{gnn_sage_forward.10} parent=0
    _
  %s9 = ssub.s32 1, %s7
  %s10 = scalar_select 0, %s9, %s7
  loop: start=0, step=1, limit=4
  $region2: #{gnn_sage_forward.10} parent=0 // loop_pre_header
    _
  $region3: #{gnn_sage_forward.10} parent=0 // loop_header
    %s12 = sphi 0, %s16
    %p13 = scmp.ge.s32.totalorder %s12, 4
    %s19 = sphi 0, %s31
    %s20 = sphi 0, %s27
    %s21 = sphi 0, %s19
    %s22 = sphi 0, %s20
    %s23 = sphi 0, %s21
    %s24 = sphi 0, %s22
    %s36 = sphi 0, %s38
    %s39 = sphi 0, %s36
    %s40 = sphi 0, %s39
    %s56 = sphi 0, %s40
    %s62 = sphi 0, %s64
    %s65 = sphi 0, %s62
    %s66 = sphi 0, %s65
    %s82 = sphi 0, %s66
    %s88 = sphi 0, %s90
    %s91 = sphi 0, %s88
    %s92 = sphi 0, %s91
    %s108 = sphi 0, %s92
    %s112 = sphi 0, %s112
    %s114 = sphi 0, %s112
    %s115 = sphi 0, %s114
    %s129 = sphi 0, %s115
    %s133 = sphi 0, %s133
    %s135 = sphi 0, %s133
    %s136 = sphi 0, %s135
    %s150 = sphi 0, %s136
    %s156 = sphi 0, %s158
    %s159 = sphi 0, %s156
    %s160 = sphi 0, %s159
    %s176 = sphi 0, %s160
    %s182 = sphi 0, %s184
    %s185 = sphi 0, %s182
    %s186 = sphi 0, %s185
    %s202 = sphi 0, %s186
  $region4: #{gnn_sage_forward.10} parent=0 // loop_header_branch
    %15 = sbr.rel (%p13) target = $region8
  $region5: #{gnn_sage_forward.10} parent=0 // loop_body
    %s17 = ssub.s32 %s12, 1
    %s18 = ssub.s32 %s12, 2
    %s25 = sadd.s32 1, %s20
    %p26 = scmp.ge.s32.totalorder %s25, 1
    %s27 = scalar_select %p26, 0, %s25
    %s28 = sadd.s32 1, %s19
    %s29 = scalar_select %p26, %s28, %s19
    %p30 = scmp.ge.s32.totalorder %s29, 2
    %s31 = scalar_select %p30, 0, %s29
    %s32 = ssub.s32 %s19, %s31
    %s33 = ssub.s32 %s20, %s27
    %s34 = sor.u32 %s32, %s33
    %p35 = scmp.eq.s32.totalorder %s34, 0
    %s37 = sadd.s32 %s36, 1
    %s38 = scalar_select %p35, %s36, %s37
    %p41 = pneg %p35
    %p42 = scmp.eq.s32.totalorder %s12, 1
    %p43 = por %p41, %p42
    %p44 = scmp.ne.s32.totalorder %s36, %s39
    %p45 = scmp.eq.s32.totalorder %s12, 0
    %p46 = por %p44, %p45
    %p47 = scmp.ne.s32.totalorder %s36, %s39
    %p48 = scmp.eq.s32.totalorder %s17, 1
    %p49 = por %p47, %p48
    %p50 = scmp.ne.s32.totalorder %s39, %s40
    %p51 = scmp.eq.s32.totalorder %s17, 0
    %p52 = por %p50, %p51
    %p53 = scmp.ne.s32.totalorder %s39, %s40
    %p54 = scmp.eq.s32.totalorder %s18, 1
    %p55 = por %p53, %p54
    %p57 = scmp.ne.s32.totalorder %s40, %s56
    %p58 = scmp.eq.s32.totalorder %s18, 0
    %p59 = por %p57, %p58
    %s60 = ssub.s32 %s20, %s27
    %p61 = scmp.eq.s32.totalorder %s60, 0
    %s63 = sadd.s32 %s62, 1
    %s64 = scalar_select %p61, %s62, %s63
    %p67 = pneg %p61
    %p68 = scmp.eq.s32.totalorder %s12, 1
    %p69 = por %p67, %p68
    %p70 = scmp.ne.s32.totalorder %s62, %s65
    %p71 = scmp.eq.s32.totalorder %s12, 0
    %p72 = por %p70, %p71
    %p73 = scmp.ne.s32.totalorder %s62, %s65
    %p74 = scmp.eq.s32.totalorder %s17, 1
    %p75 = por %p73, %p74
    %p76 = scmp.ne.s32.totalorder %s65, %s66
    %p77 = scmp.eq.s32.totalorder %s17, 0
    %p78 = por %p76, %p77
    %p79 = scmp.ne.s32.totalorder %s65, %s66
    %p80 = scmp.eq.s32.totalorder %s18, 1
    %p81 = por %p79, %p80
    %p83 = scmp.ne.s32.totalorder %s66, %s82
    %p84 = scmp.eq.s32.totalorder %s18, 0
    %p85 = por %p83, %p84
    %s86 = ssub.s32 %s19, %s31
    %p87 = scmp.eq.s32.totalorder %s86, 0
    %s89 = sadd.s32 %s88, 1
    %s90 = scalar_select %p87, %s88, %s89
    %p93 = pneg %p87
    %p94 = scmp.eq.s32.totalorder %s12, 1
    %p95 = por %p93, %p94
    %p96 = scmp.ne.s32.totalorder %s88, %s91
    %p97 = scmp.eq.s32.totalorder %s12, 0
    %p98 = por %p96, %p97
    %p99 = scmp.ne.s32.totalorder %s88, %s91
    %p100 = scmp.eq.s32.totalorder %s17, 1
    %p101 = por %p99, %p100
    %p102 = scmp.ne.s32.totalorder %s91, %s92
    %p103 = scmp.eq.s32.totalorder %s17, 0
    %p104 = por %p102, %p103
    %p105 = scmp.ne.s32.totalorder %s91, %s92
    %p106 = scmp.eq.s32.totalorder %s18, 1
    %p107 = por %p105, %p106
    %p109 = scmp.ne.s32.totalorder %s92, %s108
    %p110 = scmp.eq.s32.totalorder %s18, 0
    %p111 = por %p109, %p110
    %s113 = sadd.s32 %s112, 1
    %p116 = scmp.eq.s32.totalorder %s12, 1
    %p117 = scmp.ne.s32.totalorder %s112, %s114
    %p118 = scmp.eq.s32.totalorder %s12, 0
    %p119 = por %p117, %p118
    %p120 = scmp.ne.s32.totalorder %s112, %s114
    %p121 = scmp.eq.s32.totalorder %s17, 1
    %p122 = por %p120, %p121
    %p123 = scmp.ne.s32.totalorder %s114, %s115
    %p124 = scmp.eq.s32.totalorder %s17, 0
    %p125 = por %p123, %p124
    %p126 = scmp.ne.s32.totalorder %s114, %s115
    %p127 = scmp.eq.s32.totalorder %s18, 1
    %p128 = por %p126, %p127
    %p130 = scmp.ne.s32.totalorder %s115, %s129
    %p131 = scmp.eq.s32.totalorder %s18, 0
    %p132 = por %p130, %p131
    %s134 = sadd.s32 %s133, 1
    %p137 = scmp.eq.s32.totalorder %s12, 1
    %p138 = scmp.ne.s32.totalorder %s133, %s135
    %p139 = scmp.eq.s32.totalorder %s12, 0
    %p140 = por %p138, %p139
    %p141 = scmp.ne.s32.totalorder %s133, %s135
    %p142 = scmp.eq.s32.totalorder %s17, 1
    %p143 = por %p141, %p142
    %p144 = scmp.ne.s32.totalorder %s135, %s136
    %p145 = scmp.eq.s32.totalorder %s17, 0
    %p146 = por %p144, %p145
    %p147 = scmp.ne.s32.totalorder %s135, %s136
    %p148 = scmp.eq.s32.totalorder %s18, 1
    %p149 = por %p147, %p148
    %p151 = scmp.ne.s32.totalorder %s136, %s150
    %p152 = scmp.eq.s32.totalorder %s18, 0
    %p153 = por %p151, %p152
    %s154 = ssub.s32 %s19, %s31
    %p155 = scmp.eq.s32.totalorder %s154, 0
    %s157 = sadd.s32 %s156, 1
    %s158 = scalar_select %p155, %s156, %s157
    %p161 = pneg %p155
    %p162 = scmp.eq.s32.totalorder %s12, 1
    %p163 = por %p161, %p162
    %p164 = scmp.ne.s32.totalorder %s156, %s159
    %p165 = scmp.eq.s32.totalorder %s12, 0
    %p166 = por %p164, %p165
    %p167 = scmp.ne.s32.totalorder %s156, %s159
    %p168 = scmp.eq.s32.totalorder %s17, 1
    %p169 = por %p167, %p168
    %p170 = scmp.ne.s32.totalorder %s159, %s160
    %p171 = scmp.eq.s32.totalorder %s17, 0
    %p172 = por %p170, %p171
    %p173 = scmp.ne.s32.totalorder %s159, %s160
    %p174 = scmp.eq.s32.totalorder %s18, 1
    %p175 = por %p173, %p174
    %p177 = scmp.ne.s32.totalorder %s160, %s176
    %p178 = scmp.eq.s32.totalorder %s18, 0
    %p179 = por %p177, %p178
    %s180 = ssub.s32 %s19, %s31
    %p181 = scmp.eq.s32.totalorder %s180, 0
    %s183 = sadd.s32 %s182, 1
    %s184 = scalar_select %p181, %s182, %s183
    %p187 = pneg %p181
    %p188 = scmp.eq.s32.totalorder %s12, 1
    %p189 = por %p187, %p188
    %p190 = scmp.ne.s32.totalorder %s182, %s185
    %p191 = scmp.eq.s32.totalorder %s12, 0
    %p192 = por %p190, %p191
    %p193 = scmp.ne.s32.totalorder %s182, %s185
    %p194 = scmp.eq.s32.totalorder %s17, 1
    %p195 = por %p193, %p194
    %p196 = scmp.ne.s32.totalorder %s185, %s186
    %p197 = scmp.eq.s32.totalorder %s17, 0
    %p198 = por %p196, %p197
    %p199 = scmp.ne.s32.totalorder %s185, %s186
    %p200 = scmp.eq.s32.totalorder %s18, 1
    %p201 = por %p199, %p200
    %p203 = scmp.ne.s32.totalorder %s186, %s202
    %p204 = scmp.eq.s32.totalorder %s18, 0
    %p205 = por %p203, %p204
    %p206 = scmp.le.s32.totalorder 1, %s12
    %p207 = scmp.lt.s32.totalorder %s12, 3
    %p208 = pnand %p206, %p207
    %p209 = pneg %p208
    // Predicated region
    $region9: #{gnn_sage_forward.10} parent=5 // pred_check
      _
    $region10: #{gnn_sage_forward.10} parent=5 // pred_check_branch
      %211 = sbr.rel (%p208) target = $region12
    $region11: #{gnn_sage_forward.10} parent=5 // pred_region
      %s212 = ssub.s32 %s12, 1
      // Predicated region
      $region13: #{gnn_sage_forward.10} parent=11 // pred_check
        %p213 = pneg %p78
      $region14: #{gnn_sage_forward.10} parent=11 // pred_check_branch
        %215 = sbr.rel (%p213) target = $region16
      $region15: #{gnn_sage_forward.10} parent=11 // pred_region
        %s216 = smul.u32 16, %s22
        %p217 = scmp.lt.s32.totalorder %s216, 15
        %s218 = scalar_select %p217, %s216, 15
        %s219 = smul.addr %s218, 4
        %s220 = scalar_lea.vmem %s1, %s219
        %s221 = smul.u32 16, %s22
      $region16: #{gnn_sage_forward.10} parent=11 // pred_fallthru
        _
      // Predicated region
      $region17: #{gnn_sage_forward.10} parent=11 // pred_check
        %p222 = pneg %p125
      $region18: #{gnn_sage_forward.10} parent=11 // pred_check_branch
        %224 = sbr.rel (%p222) target = $region20
      $region19: #{gnn_sage_forward.10} parent=11 // pred_region
        _
      $region20: #{gnn_sage_forward.10} parent=11 // pred_fallthru
        _
      // Predicated region
      $region21: #{gnn_sage_forward.10} parent=11 // pred_check
        %p225 = pneg %p146
      $region22: #{gnn_sage_forward.10} parent=11 // pred_check_branch
        %227 = sbr.rel (%p225) target = $region24
      $region23: #{gnn_sage_forward.10} parent=11 // pred_region
        _
      $region24: #{gnn_sage_forward.10} parent=11 // pred_fallthru
        _
    $region12: #{gnn_sage_forward.10} parent=5 // pred_fallthru
      _
    %p228 = scmp.lt.s32.totalorder %s12, 2
    // Predicated region
    $region25: #{gnn_sage_forward.10} parent=5 // pred_check
      %p229 = pneg %p228
    $region26: #{gnn_sage_forward.10} parent=5 // pred_check_branch
      %231 = sbr.rel (%p229) target = $region28
    $region27: #{gnn_sage_forward.10} parent=5 // pred_region
      // Predicated region
      $region29: #{gnn_sage_forward.10} parent=27 // pred_check
        %p232 = pneg %p46
      $region30: #{gnn_sage_forward.10} parent=27 // pred_check_branch
        %234 = sbr.rel (%p232) target = $region32
      $region31: #{gnn_sage_forward.10} parent=27 // pred_region
        %s235 = smul.u32 2, %s19
        %p236 = scmp.lt.s32.totalorder %s235, 3
        %s237 = scalar_select %p236, %s235, 3
        %p238 = scmp.lt.s32.totalorder %s20, 0
        %s239 = scalar_select %p238, %s20, 0
        %s240 = sadd.s32 %s239, %s237
        %s241 = smul.addr %s240, 4
        %s242 = scalar_lea.vmem %s0, %s241
        %s243 = smul.u32 2, %s19
      $region32: #{gnn_sage_forward.10} parent=27 // pred_fallthru
        _
      // Predicated region
      $region33: #{gnn_sage_forward.10} parent=27 // pred_check
        %p244 = pneg %p98
      $region34: #{gnn_sage_forward.10} parent=27 // pred_check_branch
        %246 = sbr.rel (%p244) target = $region36
      $region35: #{gnn_sage_forward.10} parent=27 // pred_region
        %s247 = smul.u32 2, %s19
        %p248 = scmp.lt.s32.totalorder %s247, 3
        %s249 = scalar_select %p248, %s247, 3
        %s250 = smul.addr %s249, 4
        %s251 = scalar_lea.vmem %s2, %s250
        %s252 = smul.u32 2, %s19
      $region36: #{gnn_sage_forward.10} parent=27 // pred_fallthru
        _
      // Predicated region
      $region37: #{gnn_sage_forward.10} parent=27 // pred_check
        %p253 = pneg %p166
      $region38: #{gnn_sage_forward.10} parent=27 // pred_check_branch
        %255 = sbr.rel (%p253) target = $region40
      $region39: #{gnn_sage_forward.10} parent=27 // pred_region
        %s256 = smul.u32 2, %s19
        %p257 = scmp.lt.s32.totalorder %s256, 3
        %s258 = scalar_select %p257, %s256, 3
        %s259 = smul.addr %s258, 8
        %s260 = scalar_lea.vmem %s5, %s259
        %s261 = smul.u32 2, %s19
      $region40: #{gnn_sage_forward.10} parent=27 // pred_fallthru
        _
    $region28: #{gnn_sage_forward.10} parent=5 // pred_fallthru
      _
    %p262 = scmp.le.s32.totalorder 1, %s12
    %p263 = scmp.lt.s32.totalorder %s12, 3
    %p264 = pnand %p262, %p263
    %p265 = pneg %p264
    // Predicated region
    $region41: #{gnn_sage_forward.10} parent=5 // pred_check
      _
    $region42: #{gnn_sage_forward.10} parent=5 // pred_check_branch
      %267 = sbr.rel (%p264) target = $region44
    $region43: #{gnn_sage_forward.10} parent=5 // pred_region
      %s268 = ssub.s32 %s12, 1
      %s269 = smul.u32 2, %s21
      %p270 = scmp.lt.s32.totalorder %s269, 3
      %s271 = scalar_select %p270, %s269, 3
      %p272 = scmp.lt.s32.totalorder %s22, 0
      %s273 = scalar_select %p272, %s22, 0
      %s274 = sadd.s32 %s273, %s271
      %s275 = smul.addr %s274, 4
      %s276 = scalar_lea.vmem %s0, %s275
      %p277 = pneg %p52
      %p278 = pneg %p49
      %s279 = smul.u32 16, %s22
      %p280 = scmp.lt.s32.totalorder %s279, 15
      %s281 = scalar_select %p280, %s279, 15
      %s282 = smul.addr %s281, 4
      %s283 = scalar_lea.vmem %s1, %s282
      %p284 = pneg %p78
      %p285 = pneg %p75
      %s286 = smul.u32 2, %s21
      %p287 = scmp.lt.s32.totalorder %s286, 3
      %s288 = scalar_select %p287, %s286, 3
      %s289 = smul.addr %s288, 4
      %s290 = scalar_lea.vmem %s2, %s289
      %p291 = pneg %p104
      %p292 = pneg %p101
      %p293 = pneg %p125
      %p294 = pneg %p122
      %p295 = pneg %p146
      %p296 = pneg %p143
      %s297 = smul.u32 2, %s21
      %p298 = scmp.lt.s32.totalorder %s297, 3
      %s299 = scalar_select %p298, %s297, 3
      %s300 = smul.addr %s299, 8
      %s301 = scalar_lea.vmem %s5, %s300
      %p302 = pneg %p172
      %p303 = pneg %p169
      %p304 = pneg %p198
      %p305 = pneg %p195
      %s306 = smul.u32 2, %s21
      %p307 = scmp.lt.s32.totalorder %s306, 3
      %s308 = scalar_select %p307, %s306, 3
      %s309 = smul.addr %s308, 4
      %s310 = scalar_lea.vmem %s6, %s309
      %s311 = smul.u32 2, %s21
      %p312 = scmp.lt.s32.totalorder %s311, 3
      %s313 = scalar_select %p312, %s311, 3
      %p314 = scmp.lt.s32.totalorder %s22, 0
      %s315 = scalar_select %p314, %s22, 0
      %s316 = sadd.s32 %s315, %s313
      %s317 = smul.addr %s316, 4
      %s318 = scalar_lea.vmem %s0, %s317
      %s319 = smul.u32 2, %s21
      %s320 = smul.u32 16, %s22
      %p321 = scmp.lt.s32.totalorder %s320, 15
      %s322 = scalar_select %p321, %s320, 15
      %s323 = smul.addr %s322, 4
      %s324 = scalar_lea.vmem %s1, %s323
      %s325 = smul.u32 16, %s22
      %s326 = smul.u32 2, %s21
      %p327 = scmp.lt.s32.totalorder %s326, 3
      %s328 = scalar_select %p327, %s326, 3
      %s329 = smul.addr %s328, 4
      %s330 = scalar_lea.vmem %s2, %s329
      %s331 = smul.u32 2, %s21
      %s332 = smul.u32 2, %s21
      %p333 = scmp.lt.s32.totalorder %s332, 3
      %s334 = scalar_select %p333, %s332, 3
      %s335 = smul.addr %s334, 8
      %s336 = scalar_lea.vmem %s5, %s335
      %s337 = smul.u32 2, %s21
      %s338 = smul.u32 2, %s21
      %p339 = scmp.lt.s32.totalorder %s338, 3
      %s340 = scalar_select %p339, %s338, 3
      %s341 = smul.addr %s340, 4
      %s342 = scalar_lea.vmem %s6, %s341
      %s343 = smul.u32 2, %s21
      %p345 = scmp.eq.s32.totalorder %s22, 0
      // Predicated region
      $region45: #{gnn_sage_forward.10} parent=43 // pred_check
        %p346 = pneg %p345
      $region46: #{gnn_sage_forward.10} parent=43 // pred_check_branch
        %348 = sbr.rel (%p346) target = $region48
      $region47: #{gnn_sage_forward.10} parent=43 // pred_region
        %349 = vst [vmem:[#allocation2] sm:$0xff] 0.0
        %350 = vst [vmem:[#allocation2 + $0x8] sm:$0xff] 0.0
      $region48: #{gnn_sage_forward.10} parent=43 // pred_fallthru
        _
      %v351 = vld [vmem:[#allocation2] sm:$0xff]
      %v352 = vld [vmem:[#allocation2 + $0x8] sm:$0xff]
      %v353 = vld [vmem:[%s318] sm:$0xf]
      %v354 = vld [vmem:[%s318 + $0x4] sm:$0xf]
      %v355 = vld [vmem:[%s324] sm:$0xf]
      %v356 = vld [vmem:[%s324 + $0x4] sm:$0xf]
      %v357 = vld [vmem:[%s324 + $0x8] sm:$0xf]
      %v358 = vld [vmem:[%s324 + $0xc] sm:$0xf]
      %v359 = vld [vmem:[%s324 + $0x10] sm:$0xf]
      %v360 = vld [vmem:[%s324 + $0x14] sm:$0xf]
      %v361 = vld [vmem:[%s324 + $0x18] sm:$0xf]
      %v362 = vld [vmem:[%s324 + $0x1c] sm:$0xf]
      %v363 = vld [vmem:[%s324 + $0x20] sm:$0xf]
      %v364 = vld [vmem:[%s324 + $0x24] sm:$0xf]
      %v365 = vld [vmem:[%s324 + $0x28] sm:$0xf]
      %v366 = vld [vmem:[%s324 + $0x2c] sm:$0xf]
      %v367 = vld [vmem:[%s324 + $0x30] sm:$0xf]
      %v368 = vld [vmem:[%s324 + $0x34] sm:$0xf]
      %v369 = vld [vmem:[%s324 + $0x38] sm:$0xf]
      %v370 = vld [vmem:[%s324 + $0x3c] sm:$0xf]
      %v373 = vunpack.c.l.b16 %v353
      %v374 = vunpack.c.l.b16 %v354
      %v375 = vpack.c.b16 %v374, %v373
      %v393 = vunpack.c.l.b16 %v355
      %v394 = vunpack.c.l.b16 %v356
      %v395 = vunpack.c.l.b16 %v357
      %v396 = vunpack.c.l.b16 %v358
      %v397 = vunpack.c.l.b16 %v359
      %v398 = vunpack.c.l.b16 %v360
      %v399 = vunpack.c.l.b16 %v361
      %v400 = vunpack.c.l.b16 %v362
      %v401 = vunpack.c.l.b16 %v363
      %v402 = vunpack.c.l.b16 %v364
      %v403 = vunpack.c.l.b16 %v365
      %v404 = vunpack.c.l.b16 %v366
      %v405 = vunpack.c.l.b16 %v367
      %v406 = vunpack.c.l.b16 %v368
      %v407 = vunpack.c.l.b16 %v369
      %v408 = vunpack.c.l.b16 %v370
      %v409 = vpack.c.b16 %v394, %v393
      %v410 = vpack.c.b16 %v396, %v395
      %v411 = vpack.c.b16 %v398, %v397
      %v412 = vpack.c.b16 %v400, %v399
      %v413 = vpack.c.b16 %v402, %v401
      %v414 = vpack.c.b16 %v404, %v403
      %v415 = vpack.c.b16 %v406, %v405
      %v416 = vpack.c.b16 %v408, %v407
      %425 = vmatprep.subr.bf16.mxu0 0
      %426 = vmatpush1.bf16.msra.mxu0 %v409
      %427 = vmatprep.subr.bf16.mxu0 0
      %428 = vmatpush1.bf16.msra.mxu0 %v410
      %429 = vmatprep.subr.bf16.mxu0 0
      %430 = vmatpush1.bf16.msra.mxu0 %v411
      %431 = vmatprep.subr.bf16.mxu0 0
      %432 = vmatpush1.bf16.msra.mxu0 %v412
      %433 = vmatprep.subr.bf16.mxu0 0
      %434 = vmatpush1.bf16.msra.mxu0 %v413
      %435 = vmatprep.subr.bf16.mxu0 0
      %436 = vmatpush1.bf16.msra.mxu0 %v414
      %437 = vmatprep.subr.bf16.mxu0 0
      %438 = vmatpush1.bf16.msra.mxu0 %v415
      %439 = vmatprep.subr.bf16.mxu0 0
      %440 = vmatpush1.bf16.msra.mxu0 %v416
      %441 = vmatprep.subr.bf16.mxu0 0
      %442 = vmatpush1.bf16.msra.mxu0 0
      %443 = vmatprep.subr.bf16.mxu0 0
      %444 = vmatpush1.bf16.msra.mxu0 0
      %445 = vmatprep.subr.bf16.mxu0 0
      %446 = vmatpush1.bf16.msra.mxu0 0
      %447 = vmatprep.subr.bf16.mxu0 0
      %448 = vmatpush1.bf16.msra.mxu0 0
      %449 = vmatprep.subr.bf16.mxu0 0
      %450 = vmatpush1.bf16.msra.mxu0 0
      %451 = vmatprep.subr.bf16.mxu0 0
      %452 = vmatpush1.bf16.msra.mxu0 0
      %453 = vmatprep.subr.bf16.mxu0 0
      %454 = vmatpush1.bf16.msra.mxu0 0
      %455 = vmatprep.subr.bf16.mxu0 0
      %456 = vmatpush1.bf16.msra.mxu0 0
      %457 = vmatprep.mubr.bf16.mxu0 0
      %458 = vmatmul.mubr.bf16.gmra.mrb[0].mxu0 %v375
      %v459 = vpop.f32.mrb[0].mxu0
      %v460 = vadd.f32 0.0, %v459
      %v461 = vpop.f32.mrb[0].mxu0
      %v462 = vpop.f32.mrb[0].mxu0
      %v463 = vadd.f32 0.0, %v462
      %v464 = vpop.f32.mrb[0].mxu0
      %465 = vdwg.mxu0
      %v466 = vadd.f32 %v351, %v460
      %v467 = vadd.f32 %v352, %v463
      %468 = vst [vmem:[#allocation2] sm:$0xff] %v466
      %469 = vst [vmem:[#allocation2 + $0x8] sm:$0xff] %v467
      // Predicated region
      $region49: #{gnn_sage_forward.10} parent=43 // pred_check
        %p470 = pneg %p345
      $region50: #{gnn_sage_forward.10} parent=43 // pred_check_branch
        %472 = sbr.rel (%p470) target = $region52
      $region51: #{gnn_sage_forward.10} parent=43 // pred_region
        %v473 = vld [vmem:[#allocation2] sm:$0xff]
        %v474 = vld [vmem:[#allocation2 + $0x8] sm:$0xff]
        %v475 = vld [vmem:[%s336] sm:$0xff]
        %v476 = vld [vmem:[%s336 + $0x8] sm:$0xff]
        %478 = vset.pattern.permute.xlu0 0
        %479 = vperm.xlu0 %478, %v475
        %v480 = vpop.permute.xlu0 %479
        %483 = vset.pattern.permute.xlu0 0
        %484 = vperm.xlu0 %483, %v476
        %v485 = vpop.permute.xlu0 %484
        %v487 = vmul.f32 %v473, %v480
        %v488 = vmul.f32 %v474, %v485
        %v489 = vld [vmem:[%s330] sm:$0xf]
        %v490 = vld [vmem:[%s330 + $0x4] sm:$0xf]
        %v491 = vld [vmem:[%s3] sm:$0xf]
        %v492 = vld [vmem:[%s3 + $0x4] sm:$0xf]
        %v493 = vld [vmem:[%s3 + $0x8] sm:$0xf]
        %v494 = vld [vmem:[%s3 + $0xc] sm:$0xf]
        %v495 = vld [vmem:[%s3 + $0x10] sm:$0xf]
        %v496 = vld [vmem:[%s3 + $0x14] sm:$0xf]
        %v497 = vld [vmem:[%s3 + $0x18] sm:$0xf]
        %v498 = vld [vmem:[%s3 + $0x1c] sm:$0xf]
        %v499 = vld [vmem:[%s3 + $0x20] sm:$0xf]
        %v500 = vld [vmem:[%s3 + $0x24] sm:$0xf]
        %v501 = vld [vmem:[%s3 + $0x28] sm:$0xf]
        %v502 = vld [vmem:[%s3 + $0x2c] sm:$0xf]
        %v503 = vld [vmem:[%s3 + $0x30] sm:$0xf]
        %v504 = vld [vmem:[%s3 + $0x34] sm:$0xf]
        %v505 = vld [vmem:[%s3 + $0x38] sm:$0xf]
        %v506 = vld [vmem:[%s3 + $0x3c] sm:$0xf]
        %v507 = vld [vmem:[%s4] sm:$0x1]
        %v509 = vlaneseq
        %v510 = vshrl.u32 %v509, 7
        %v511 = vsub.s32 0, %v510
        %v512 = vrot.slane %v507, %v511
        %v516 = vunpack.c.l.b16 %v489
        %v517 = vunpack.c.l.b16 %v490
        %v518 = vpack.c.b16 %v517, %v516
        %v536 = vunpack.c.l.b16 %v491
        %v537 = vunpack.c.l.b16 %v492
        %v538 = vunpack.c.l.b16 %v493
        %v539 = vunpack.c.l.b16 %v494
        %v540 = vunpack.c.l.b16 %v495
        %v541 = vunpack.c.l.b16 %v496
        %v542 = vunpack.c.l.b16 %v497
        %v543 = vunpack.c.l.b16 %v498
        %v544 = vunpack.c.l.b16 %v499
        %v545 = vunpack.c.l.b16 %v500
        %v546 = vunpack.c.l.b16 %v501
        %v547 = vunpack.c.l.b16 %v502
        %v548 = vunpack.c.l.b16 %v503
        %v549 = vunpack.c.l.b16 %v504
        %v550 = vunpack.c.l.b16 %v505
        %v551 = vunpack.c.l.b16 %v506
        %v552 = vpack.c.b16 %v537, %v536
        %v553 = vpack.c.b16 %v539, %v538
        %v554 = vpack.c.b16 %v541, %v540
        %v555 = vpack.c.b16 %v543, %v542
        %v556 = vpack.c.b16 %v545, %v544
        %v557 = vpack.c.b16 %v547, %v546
        %v558 = vpack.c.b16 %v549, %v548
        %v559 = vpack.c.b16 %v551, %v550
        %568 = vmatprep.subr.bf16.mxu0 0
        %569 = vmatpush1.bf16.msra.mxu0 %v552
        %570 = vmatprep.subr.bf16.mxu0 0
        %571 = vmatpush1.bf16.msra.mxu0 %v553
        %572 = vmatprep.subr.bf16.mxu0 0
        %573 = vmatpush1.bf16.msra.mxu0 %v554
        %574 = vmatprep.subr.bf16.mxu0 0
        %575 = vmatpush1.bf16.msra.mxu0 %v555
        %576 = vmatprep.subr.bf16.mxu0 0
        %577 = vmatpush1.bf16.msra.mxu0 %v556
        %578 = vmatprep.subr.bf16.mxu0 0
        %579 = vmatpush1.bf16.msra.mxu0 %v557
        %580 = vmatprep.subr.bf16.mxu0 0
        %581 = vmatpush1.bf16.msra.mxu0 %v558
        %582 = vmatprep.subr.bf16.mxu0 0
        %583 = vmatpush1.bf16.msra.mxu0 %v559
        %584 = vmatprep.subr.bf16.mxu0 0
        %585 = vmatpush1.bf16.msra.mxu0 0
        %586 = vmatprep.subr.bf16.mxu0 0
        %587 = vmatpush1.bf16.msra.mxu0 0
        %588 = vmatprep.subr.bf16.mxu0 0
        %589 = vmatpush1.bf16.msra.mxu0 0
        %590 = vmatprep.subr.bf16.mxu0 0
        %591 = vmatpush1.bf16.msra.mxu0 0
        %592 = vmatprep.subr.bf16.mxu0 0
        %593 = vmatpush1.bf16.msra.mxu0 0
        %594 = vmatprep.subr.bf16.mxu0 0
        %595 = vmatpush1.bf16.msra.mxu0 0
        %596 = vmatprep.subr.bf16.mxu0 0
        %597 = vmatpush1.bf16.msra.mxu0 0
        %598 = vmatprep.subr.bf16.mxu0 0
        %599 = vmatpush1.bf16.msra.mxu0 0
        %600 = vmatprep.mubr.bf16.mxu0 0
        %601 = vmatmul.mubr.bf16.gmra.mrb[0].mxu0 %v518
        %v602 = vpop.f32.mrb[0].mxu0
        %v603 = vadd.f32 %v512, %v602
        %v604 = vpop.f32.mrb[0].mxu0
        %v605 = vpop.f32.mrb[0].mxu0
        %v606 = vadd.f32 %v512, %v605
        %v607 = vpop.f32.mrb[0].mxu0
        %608 = vdwg.mxu0
        %v609 = vadd.f32 %v487, %v603
        %v610 = vadd.f32 %v488, %v606
        %vm611 = vcmp.ge.f32.partialorder %v609, 0.0
        %vm612 = vcmp.ge.f32.partialorder %v610, 0.0
        %v613 = vmul.f32 %v609, 0.01
        %v614 = vmul.f32 %v610, 0.01
        %v615 = vsel %vm611, %v609, %v613
        %v616 = vsel %vm612, %v610, %v614
        %v617 = vpack.c.bf16 %v616, %v615
        %v619 = vunpack.c.l.b16 %v617
        %v620 = vunpack.c.h.b16 %v617
        %v621 = vpack.c.b16 %v619, %v619
        %v622 = vpack.c.b16 %v620, %v620
        %625 = vst [vmem:[%s342] sm:$0xf] %v621
        %626 = vst [vmem:[%s342 + $0x4] sm:$0xf] %v622
      $region52: #{gnn_sage_forward.10} parent=43 // pred_fallthru
        _
      %s627 = smul.u32 2, %s21
      %p628 = scmp.lt.s32.totalorder %s627, 3
      %s629 = scalar_select %p628, %s627, 3
      %s630 = smul.addr %s629, 4
      %s631 = scalar_lea.vmem %s6, %s630
      // Predicated region
      $region53: #{gnn_sage_forward.10} parent=43 // pred_check
        %p632 = pneg %p195
      $region54: #{gnn_sage_forward.10} parent=43 // pred_check_branch
        %634 = sbr.rel (%p632) target = $region56
      $region55: #{gnn_sage_forward.10} parent=43 // pred_region
        %s635 = smul.u32 2, %s21
      $region56: #{gnn_sage_forward.10} parent=43 // pred_fallthru
        _
    $region44: #{gnn_sage_forward.10} parent=5 // pred_fallthru
      _
    %p636 = scmp.le.s32.totalorder 2, %s12
    // Predicated region
    $region57: #{gnn_sage_forward.10} parent=5 // pred_check
      %p637 = pneg %p636
    $region58: #{gnn_sage_forward.10} parent=5 // pred_check_branch
      %639 = sbr.rel (%p637) target = $region60
    $region59: #{gnn_sage_forward.10} parent=5 // pred_region
      %s640 = ssub.s32 %s12, 2
      // Predicated region
      $region61: #{gnn_sage_forward.10} parent=59 // pred_check
        %p641 = pneg %p201
      $region62: #{gnn_sage_forward.10} parent=59 // pred_check_branch
        %643 = sbr.rel (%p641) target = $region64
      $region63: #{gnn_sage_forward.10} parent=59 // pred_region
        %s644 = smul.u32 2, %s23
        %p645 = scmp.lt.s32.totalorder %s644, 3
        %s646 = scalar_select %p645, %s644, 3
        %s647 = smul.addr %s646, 4
        %s648 = scalar_lea.vmem %s6, %s647
      $region64: #{gnn_sage_forward.10} parent=59 // pred_fallthru
        _
    $region60: #{gnn_sage_forward.10} parent=5 // pred_fallthru
      _
  $region6: #{gnn_sage_forward.10} parent=0 // loop_footer
    %s16 = sadd.s32 1, %s12
  $region7: #{gnn_sage_forward.10} parent=0 // loop_footer_branch
    %11 = sbr.rel target = $region3
  $region8: #{gnn_sage_forward.10} parent=0 // loop_exit
    _

// kernel: gnn_sage_forward.15
$region0: #{gnn_sage_forward.15}
  #allocation0 [shape = 'u32[]', space=smem, size = 0x4, offset = 0x4, fixed_abs, tag = 'smem constant byte address 0x4 - core index']
  #allocation1 [shape = 'u32[144,128]{1,0:T(1,128)}', space=vmem, size = 0x12000, scoped, tag = 'internal scratch']
  #allocation2 [shape = 'f32[16,128]{1,0:T(8,128)}', space=vmem, size = 0x2000, scoped, tag = 'scratch operand']
  %s0 = inlined_call_operand.vmem [shape: bf16[16,128], index: 0, kind: input, shape index: {}]
  %s1 = inlined_call_operand.vmem [shape: bf16[128,128], index: 1, kind: input, shape index: {}]
  %s2 = inlined_call_operand.vmem [shape: bf16[16,128], index: 2, kind: input, shape index: {}]
  %s3 = inlined_call_operand.vmem [shape: bf16[128,128], index: 3, kind: input, shape index: {}]
  %s4 = inlined_call_operand.vmem [shape: f32[1,128], index: 4, kind: input, shape index: {}]
  %s5 = inlined_call_operand.vmem [shape: f32[16,1], index: 5, kind: input, shape index: {}]
  %s6 = inlined_call_operand.hbm [shape: f32[16,128], index: 6, kind: output, shape index: {}]
  %s7 = sld [smem:[#allocation0]]
  $region42: #{gnn_sage_forward.15} parent=0
    _
  %s9 = ssub.s32 1, %s7
  %s10 = scalar_select 0, %s9, %s7
  $region1: #{gnn_sage_forward.15} parent=0
    #allocation3 [shape = 'u8[8192]{0}', space=vmem, size = 0x2000, scoped, tag = 'output window, operand 0, single buffered']
    #allocation4 [shape = 's32[1]{0}', space=sflag, size = 0x4, scoped, tag = 'scoped memory for gnn_sage_forward.15']
    %11 = vsyncpa [#allocation4], 0
    // Predicated region
    $region2: #{gnn_sage_forward.15} parent=1 // pred_check
      _
    $region3: #{gnn_sage_forward.15} parent=1 // pred_check_branch
      %13 = sbr.rel (0) target = $region5
    $region4: #{gnn_sage_forward.15} parent=1 // pred_region
      _
    $region5: #{gnn_sage_forward.15} parent=1 // pred_fallthru
      _
    // Predicated region
    $region6: #{gnn_sage_forward.15} parent=1 // pred_check
      _
    $region7: #{gnn_sage_forward.15} parent=1 // pred_check_branch
      %15 = sbr.rel (0) target = $region9
    $region8: #{gnn_sage_forward.15} parent=1 // pred_region
      _
    $region9: #{gnn_sage_forward.15} parent=1 // pred_fallthru
      _
    // Predicated region
    $region10: #{gnn_sage_forward.15} parent=1 // pred_check
      _
    $region11: #{gnn_sage_forward.15} parent=1 // pred_check_branch
      %17 = sbr.rel (0) target = $region13
    $region12: #{gnn_sage_forward.15} parent=1 // pred_region
      _
    $region13: #{gnn_sage_forward.15} parent=1 // pred_fallthru
      _
    // Predicated region
    $region14: #{gnn_sage_forward.15} parent=1 // pred_check
      _
    $region15: #{gnn_sage_forward.15} parent=1 // pred_check_branch
      %19 = sbr.rel (0) target = $region17
    $region16: #{gnn_sage_forward.15} parent=1 // pred_region
      _
    $region17: #{gnn_sage_forward.15} parent=1 // pred_fallthru
      _
    // Predicated region
    $region18: #{gnn_sage_forward.15} parent=1 // pred_check
      _
    $region19: #{gnn_sage_forward.15} parent=1 // pred_check_branch
      %21 = sbr.rel (0) target = $region21
    $region20: #{gnn_sage_forward.15} parent=1 // pred_region
      _
    $region21: #{gnn_sage_forward.15} parent=1 // pred_fallthru
      _
    // Predicated region
    $region22: #{gnn_sage_forward.15} parent=1 // pred_check
      _
    $region23: #{gnn_sage_forward.15} parent=1 // pred_check_branch
      %23 = sbr.rel (0) target = $region25
    $region24: #{gnn_sage_forward.15} parent=1 // pred_region
      _
    $region25: #{gnn_sage_forward.15} parent=1 // pred_fallthru
      _
    %p25 = scmp.eq.s32.totalorder 0, 0
    // Predicated region
    $region26: #{gnn_sage_forward.15} parent=1 // pred_check
      %p26 = pneg %p25
    $region27: #{gnn_sage_forward.15} parent=1 // pred_check_branch
      %28 = sbr.rel (%p26) target = $region29
    $region28: #{gnn_sage_forward.15} parent=1 // pred_region
      %29 = vst [vmem:[#allocation2] sm:$0xff] 0.0
      %30 = vst [vmem:[#allocation2 + $0x8] sm:$0xff] 0.0
    $region29: #{gnn_sage_forward.15} parent=1 // pred_fallthru
      _
    %v31 = vld [vmem:[#allocation2] sm:$0xff]
    %v32 = vld [vmem:[#allocation2 + $0x8] sm:$0xff]
    %v33 = vld [vmem:[%s0] sm:$0xf]
    %v34 = vld [vmem:[%s0 + $0x4] sm:$0xf]
    %v35 = vld [vmem:[%s1] sm:$0xf]
    %v36 = vld [vmem:[%s1 + $0x4] sm:$0xf]
    %v37 = vld [vmem:[%s1 + $0x8] sm:$0xf]
    %v38 = vld [vmem:[%s1 + $0xc] sm:$0xf]
    %v39 = vld [vmem:[%s1 + $0x10] sm:$0xf]
    %v40 = vld [vmem:[%s1 + $0x14] sm:$0xf]
    %v41 = vld [vmem:[%s1 + $0x18] sm:$0xf]
    %v42 = vld [vmem:[%s1 + $0x1c] sm:$0xf]
    %v43 = vld [vmem:[%s1 + $0x20] sm:$0xf]
    %v44 = vld [vmem:[%s1 + $0x24] sm:$0xf]
    %v45 = vld [vmem:[%s1 + $0x28] sm:$0xf]
    %v46 = vld [vmem:[%s1 + $0x2c] sm:$0xf]
    %v47 = vld [vmem:[%s1 + $0x30] sm:$0xf]
    %v48 = vld [vmem:[%s1 + $0x34] sm:$0xf]
    %v49 = vld [vmem:[%s1 + $0x38] sm:$0xf]
    %v50 = vld [vmem:[%s1 + $0x3c] sm:$0xf]
    %v53 = vunpack.c.l.b16 %v33
    %v54 = vunpack.c.l.b16 %v34
    %v55 = vpack.c.b16 %v54, %v53
    %v73 = vunpack.c.l.b16 %v35
    %v74 = vunpack.c.l.b16 %v36
    %v75 = vunpack.c.l.b16 %v37
    %v76 = vunpack.c.l.b16 %v38
    %v77 = vunpack.c.l.b16 %v39
    %v78 = vunpack.c.l.b16 %v40
    %v79 = vunpack.c.l.b16 %v41
    %v80 = vunpack.c.l.b16 %v42
    %v81 = vunpack.c.l.b16 %v43
    %v82 = vunpack.c.l.b16 %v44
    %v83 = vunpack.c.l.b16 %v45
    %v84 = vunpack.c.l.b16 %v46
    %v85 = vunpack.c.l.b16 %v47
    %v86 = vunpack.c.l.b16 %v48
    %v87 = vunpack.c.l.b16 %v49
    %v88 = vunpack.c.l.b16 %v50
    %v89 = vpack.c.b16 %v74, %v73
    %v90 = vpack.c.b16 %v76, %v75
    %v91 = vpack.c.b16 %v78, %v77
    %v92 = vpack.c.b16 %v80, %v79
    %v93 = vpack.c.b16 %v82, %v81
    %v94 = vpack.c.b16 %v84, %v83
    %v95 = vpack.c.b16 %v86, %v85
    %v96 = vpack.c.b16 %v88, %v87
    %105 = vmatprep.subr.bf16.mxu0 0
    %106 = vmatpush1.bf16.msra.mxu0 %v89
    %107 = vmatprep.subr.bf16.mxu0 0
    %108 = vmatpush1.bf16.msra.mxu0 %v90
    %109 = vmatprep.subr.bf16.mxu0 0
    %110 = vmatpush1.bf16.msra.mxu0 %v91
    %111 = vmatprep.subr.bf16.mxu0 0
    %112 = vmatpush1.bf16.msra.mxu0 %v92
    %113 = vmatprep.subr.bf16.mxu0 0
    %114 = vmatpush1.bf16.msra.mxu0 %v93
    %115 = vmatprep.subr.bf16.mxu0 0
    %116 = vmatpush1.bf16.msra.mxu0 %v94
    %117 = vmatprep.subr.bf16.mxu0 0
    %118 = vmatpush1.bf16.msra.mxu0 %v95
    %119 = vmatprep.subr.bf16.mxu0 0
    %120 = vmatpush1.bf16.msra.mxu0 %v96
    %121 = vmatprep.subr.bf16.mxu0 0
    %122 = vmatpush1.bf16.msra.mxu0 0
    %123 = vmatprep.subr.bf16.mxu0 0
    %124 = vmatpush1.bf16.msra.mxu0 0
    %125 = vmatprep.subr.bf16.mxu0 0
    %126 = vmatpush1.bf16.msra.mxu0 0
    %127 = vmatprep.subr.bf16.mxu0 0
    %128 = vmatpush1.bf16.msra.mxu0 0
    %129 = vmatprep.subr.bf16.mxu0 0
    %130 = vmatpush1.bf16.msra.mxu0 0
    %131 = vmatprep.subr.bf16.mxu0 0
    %132 = vmatpush1.bf16.msra.mxu0 0
    %133 = vmatprep.subr.bf16.mxu0 0
    %134 = vmatpush1.bf16.msra.mxu0 0
    %135 = vmatprep.subr.bf16.mxu0 0
    %136 = vmatpush1.bf16.msra.mxu0 0
    %137 = vmatprep.mubr.bf16.mxu0 0
    %138 = vmatmul.mubr.bf16.gmra.mrb[0].mxu0 %v55
    %v139 = vpop.f32.mrb[0].mxu0
    %v140 = vadd.f32 0.0, %v139
    %v141 = vpop.f32.mrb[0].mxu0
    %v142 = vpop.f32.mrb[0].mxu0
    %v143 = vadd.f32 0.0, %v142
    %v144 = vpop.f32.mrb[0].mxu0
    %145 = vdwg.mxu0
    %v146 = vadd.f32 %v31, %v140
    %v147 = vadd.f32 %v32, %v143
    %148 = vst [vmem:[#allocation2] sm:$0xff] %v146
    %149 = vst [vmem:[#allocation2 + $0x8] sm:$0xff] %v147
    // Predicated region
    $region30: #{gnn_sage_forward.15} parent=1 // pred_check
      %p150 = pneg %p25
    $region31: #{gnn_sage_forward.15} parent=1 // pred_check_branch
      %152 = sbr.rel (%p150) target = $region33
    $region32: #{gnn_sage_forward.15} parent=1 // pred_region
      %v153 = vld [vmem:[#allocation2] sm:$0xff]
      %v154 = vld [vmem:[#allocation2 + $0x8] sm:$0xff]
      %v155 = vld [vmem:[%s5] sm:$0xff]
      %v156 = vld [vmem:[%s5 + $0x8] sm:$0xff]
      %158 = vset.pattern.permute.xlu0 0
      %159 = vperm.xlu0 %158, %v155
      %v160 = vpop.permute.xlu0 %159
      %163 = vset.pattern.permute.xlu0 0
      %164 = vperm.xlu0 %163, %v156
      %v165 = vpop.permute.xlu0 %164
      %v167 = vmul.f32 %v153, %v160
      %v168 = vmul.f32 %v154, %v165
      %v169 = vld [vmem:[%s2] sm:$0xf]
      %v170 = vld [vmem:[%s2 + $0x4] sm:$0xf]
      %v171 = vld [vmem:[%s3] sm:$0xf]
      %v172 = vld [vmem:[%s3 + $0x4] sm:$0xf]
      %v173 = vld [vmem:[%s3 + $0x8] sm:$0xf]
      %v174 = vld [vmem:[%s3 + $0xc] sm:$0xf]
      %v175 = vld [vmem:[%s3 + $0x10] sm:$0xf]
      %v176 = vld [vmem:[%s3 + $0x14] sm:$0xf]
      %v177 = vld [vmem:[%s3 + $0x18] sm:$0xf]
      %v178 = vld [vmem:[%s3 + $0x1c] sm:$0xf]
      %v179 = vld [vmem:[%s3 + $0x20] sm:$0xf]
      %v180 = vld [vmem:[%s3 + $0x24] sm:$0xf]
      %v181 = vld [vmem:[%s3 + $0x28] sm:$0xf]
      %v182 = vld [vmem:[%s3 + $0x2c] sm:$0xf]
      %v183 = vld [vmem:[%s3 + $0x30] sm:$0xf]
      %v184 = vld [vmem:[%s3 + $0x34] sm:$0xf]
      %v185 = vld [vmem:[%s3 + $0x38] sm:$0xf]
      %v186 = vld [vmem:[%s3 + $0x3c] sm:$0xf]
      %v187 = vld [vmem:[%s4] sm:$0x1]
      %v189 = vlaneseq
      %v190 = vshrl.u32 %v189, 7
      %v191 = vsub.s32 0, %v190
      %v192 = vrot.slane %v187, %v191
      %v196 = vunpack.c.l.b16 %v169
      %v197 = vunpack.c.l.b16 %v170
      %v198 = vpack.c.b16 %v197, %v196
      %v216 = vunpack.c.l.b16 %v171
      %v217 = vunpack.c.l.b16 %v172
      %v218 = vunpack.c.l.b16 %v173
      %v219 = vunpack.c.l.b16 %v174
      %v220 = vunpack.c.l.b16 %v175
      %v221 = vunpack.c.l.b16 %v176
      %v222 = vunpack.c.l.b16 %v177
      %v223 = vunpack.c.l.b16 %v178
      %v224 = vunpack.c.l.b16 %v179
      %v225 = vunpack.c.l.b16 %v180
      %v226 = vunpack.c.l.b16 %v181
      %v227 = vunpack.c.l.b16 %v182
      %v228 = vunpack.c.l.b16 %v183
      %v229 = vunpack.c.l.b16 %v184
      %v230 = vunpack.c.l.b16 %v185
      %v231 = vunpack.c.l.b16 %v186
      %v232 = vpack.c.b16 %v217, %v216
      %v233 = vpack.c.b16 %v219, %v218
      %v234 = vpack.c.b16 %v221, %v220
      %v235 = vpack.c.b16 %v223, %v222
      %v236 = vpack.c.b16 %v225, %v224
      %v237 = vpack.c.b16 %v227, %v226
      %v238 = vpack.c.b16 %v229, %v228
      %v239 = vpack.c.b16 %v231, %v230
      %248 = vmatprep.subr.bf16.mxu0 0
      %249 = vmatpush1.bf16.msra.mxu0 %v232
      %250 = vmatprep.subr.bf16.mxu0 0
      %251 = vmatpush1.bf16.msra.mxu0 %v233
      %252 = vmatprep.subr.bf16.mxu0 0
      %253 = vmatpush1.bf16.msra.mxu0 %v234
      %254 = vmatprep.subr.bf16.mxu0 0
      %255 = vmatpush1.bf16.msra.mxu0 %v235
      %256 = vmatprep.subr.bf16.mxu0 0
      %257 = vmatpush1.bf16.msra.mxu0 %v236
      %258 = vmatprep.subr.bf16.mxu0 0
      %259 = vmatpush1.bf16.msra.mxu0 %v237
      %260 = vmatprep.subr.bf16.mxu0 0
      %261 = vmatpush1.bf16.msra.mxu0 %v238
      %262 = vmatprep.subr.bf16.mxu0 0
      %263 = vmatpush1.bf16.msra.mxu0 %v239
      %264 = vmatprep.subr.bf16.mxu0 0
      %265 = vmatpush1.bf16.msra.mxu0 0
      %266 = vmatprep.subr.bf16.mxu0 0
      %267 = vmatpush1.bf16.msra.mxu0 0
      %268 = vmatprep.subr.bf16.mxu0 0
      %269 = vmatpush1.bf16.msra.mxu0 0
      %270 = vmatprep.subr.bf16.mxu0 0
      %271 = vmatpush1.bf16.msra.mxu0 0
      %272 = vmatprep.subr.bf16.mxu0 0
      %273 = vmatpush1.bf16.msra.mxu0 0
      %274 = vmatprep.subr.bf16.mxu0 0
      %275 = vmatpush1.bf16.msra.mxu0 0
      %276 = vmatprep.subr.bf16.mxu0 0
      %277 = vmatpush1.bf16.msra.mxu0 0
      %278 = vmatprep.subr.bf16.mxu0 0
      %279 = vmatpush1.bf16.msra.mxu0 0
      %280 = vmatprep.mubr.bf16.mxu0 0
      %281 = vmatmul.mubr.bf16.gmra.mrb[0].mxu0 %v198
      %v282 = vpop.f32.mrb[0].mxu0
      %v283 = vadd.f32 %v192, %v282
      %v284 = vpop.f32.mrb[0].mxu0
      %v285 = vpop.f32.mrb[0].mxu0
      %v286 = vadd.f32 %v192, %v285
      %v287 = vpop.f32.mrb[0].mxu0
      %288 = vdwg.mxu0
      %v289 = vadd.f32 %v167, %v283
      %v290 = vadd.f32 %v168, %v286
      %291 = vst [vmem:[#allocation3] sm:$0xff] %v289
      %292 = vst [vmem:[#allocation3 + $0x8] sm:$0xff] %v290
    $region33: #{gnn_sage_forward.15} parent=1 // pred_fallthru
      _
    // Predicated region
    $region34: #{gnn_sage_forward.15} parent=1 // pred_check
      _
    $region35: #{gnn_sage_forward.15} parent=1 // pred_check_branch
      %294 = sbr.rel (0) target = $region37
    $region36: #{gnn_sage_forward.15} parent=1 // pred_region
      %s296 = ssub.s32 256, 256
      %297 = vsyncadd [#allocation4], %s296
      %s298 = sshll.u32 [#allocation3], 4
      %s299 = int_to_ptr.vmem [resolvable:$true] %s298
      %304 = dma.vmem_to_hbm [thread:$0]  %s299, 256, %s6, [#allocation4], 128, 128, 8
    $region37: #{gnn_sage_forward.15} parent=1 // pred_fallthru
      _
    // Predicated region
    $region38: #{gnn_sage_forward.15} parent=1 // pred_check
      _
    $region39: #{gnn_sage_forward.15} parent=1 // pred_check_branch
      %306 = sbr.rel (0) target = $region41
    $region40: #{gnn_sage_forward.15} parent=1 // pred_region
      %307 = dma.done [#allocation4], 256
    $region41: #{gnn_sage_forward.15} parent=1 // pred_fallthru
      _
    %308 = vsyncpa [#allocation4], 1

// kernel: gnn_sage_forward.14
$region0: #{gnn_sage_forward.14}
  #allocation0 [shape = 'u32[]', space=smem, size = 0x4, offset = 0x4, fixed_abs, tag = 'smem constant byte address 0x4 - core index']
  #allocation1 [shape = 'u32[144,128]{1,0:T(1,128)}', space=vmem, size = 0x12000, scoped, tag = 'internal scratch']
  #allocation2 [shape = 'f32[16,128]{1,0:T(8,128)}', space=vmem, size = 0x2000, scoped, tag = 'scratch operand']
  %s0 = inlined_call_operand.vmem [shape: bf16[32,128], index: 0, kind: input, shape index: {}]
  %s1 = inlined_call_operand.vmem [shape: bf16[128,128], index: 1, kind: input, shape index: {}]
  %s2 = inlined_call_operand.vmem [shape: bf16[32,128], index: 2, kind: input, shape index: {}]
  %s3 = inlined_call_operand.vmem [shape: bf16[128,128], index: 3, kind: input, shape index: {}]
  %s4 = inlined_call_operand.vmem [shape: f32[1,128], index: 4, kind: input, shape index: {}]
  %s5 = inlined_call_operand.vmem [shape: f32[32,1], index: 5, kind: input, shape index: {}]
  %s6 = inlined_call_operand.vmem [shape: f32[32,128], index: 6, kind: output, shape index: {}]
  %s7 = sld [smem:[#allocation0]]
  $region65: #{gnn_sage_forward.14} parent=0
    _
  %s9 = ssub.s32 1, %s7
  %s10 = scalar_select 0, %s9, %s7
  loop: start=0, step=1, limit=4
  $region2: #{gnn_sage_forward.14} parent=0 // loop_pre_header
    _
  $region3: #{gnn_sage_forward.14} parent=0 // loop_header
    %s12 = sphi 0, %s16
    %p13 = scmp.ge.s32.totalorder %s12, 4
    %s19 = sphi 0, %s31
    %s20 = sphi 0, %s27
    %s21 = sphi 0, %s19
    %s22 = sphi 0, %s20
    %s23 = sphi 0, %s21
    %s24 = sphi 0, %s22
    %s36 = sphi 0, %s38
    %s39 = sphi 0, %s36
    %s40 = sphi 0, %s39
    %s56 = sphi 0, %s40
    %s62 = sphi 0, %s64
    %s65 = sphi 0, %s62
    %s66 = sphi 0, %s65
    %s82 = sphi 0, %s66
    %s88 = sphi 0, %s90
    %s91 = sphi 0, %s88
    %s92 = sphi 0, %s91
    %s108 = sphi 0, %s92
    %s112 = sphi 0, %s112
    %s114 = sphi 0, %s112
    %s115 = sphi 0, %s114
    %s129 = sphi 0, %s115
    %s133 = sphi 0, %s133
    %s135 = sphi 0, %s133
    %s136 = sphi 0, %s135
    %s150 = sphi 0, %s136
    %s156 = sphi 0, %s158
    %s159 = sphi 0, %s156
    %s160 = sphi 0, %s159
    %s176 = sphi 0, %s160
    %s182 = sphi 0, %s184
    %s185 = sphi 0, %s182
    %s186 = sphi 0, %s185
    %s202 = sphi 0, %s186
  $region4: #{gnn_sage_forward.14} parent=0 // loop_header_branch
    %15 = sbr.rel (%p13) target = $region8
  $region5: #{gnn_sage_forward.14} parent=0 // loop_body
    %s17 = ssub.s32 %s12, 1
    %s18 = ssub.s32 %s12, 2
    %s25 = sadd.s32 1, %s20
    %p26 = scmp.ge.s32.totalorder %s25, 1
    %s27 = scalar_select %p26, 0, %s25
    %s28 = sadd.s32 1, %s19
    %s29 = scalar_select %p26, %s28, %s19
    %p30 = scmp.ge.s32.totalorder %s29, 2
    %s31 = scalar_select %p30, 0, %s29
    %s32 = ssub.s32 %s19, %s31
    %s33 = ssub.s32 %s20, %s27
    %s34 = sor.u32 %s32, %s33
    %p35 = scmp.eq.s32.totalorder %s34, 0
    %s37 = sadd.s32 %s36, 1
    %s38 = scalar_select %p35, %s36, %s37
    %p41 = pneg %p35
    %p42 = scmp.eq.s32.totalorder %s12, 1
    %p43 = por %p41, %p42
    %p44 = scmp.ne.s32.totalorder %s36, %s39
    %p45 = scmp.eq.s32.totalorder %s12, 0
    %p46 = por %p44, %p45
    %p47 = scmp.ne.s32.totalorder %s36, %s39
    %p48 = scmp.eq.s32.totalorder %s17, 1
    %p49 = por %p47, %p48
    %p50 = scmp.ne.s32.totalorder %s39, %s40
    %p51 = scmp.eq.s32.totalorder %s17, 0
    %p52 = por %p50, %p51
    %p53 = scmp.ne.s32.totalorder %s39, %s40
    %p54 = scmp.eq.s32.totalorder %s18, 1
    %p55 = por %p53, %p54
    %p57 = scmp.ne.s32.totalorder %s40, %s56
    %p58 = scmp.eq.s32.totalorder %s18, 0
    %p59 = por %p57, %p58
    %s60 = ssub.s32 %s20, %s27
    %p61 = scmp.eq.s32.totalorder %s60, 0
    %s63 = sadd.s32 %s62, 1
    %s64 = scalar_select %p61, %s62, %s63
    %p67 = pneg %p61
    %p68 = scmp.eq.s32.totalorder %s12, 1
    %p69 = por %p67, %p68
    %p70 = scmp.ne.s32.totalorder %s62, %s65
    %p71 = scmp.eq.s32.totalorder %s12, 0
    %p72 = por %p70, %p71
    %p73 = scmp.ne.s32.totalorder %s62, %s65
    %p74 = scmp.eq.s32.totalorder %s17, 1
    %p75 = por %p73, %p74
    %p76 = scmp.ne.s32.totalorder %s65, %s66
    %p77 = scmp.eq.s32.totalorder %s17, 0
    %p78 = por %p76, %p77
    %p79 = scmp.ne.s32.totalorder %s65, %s66
    %p80 = scmp.eq.s32.totalorder %s18, 1
    %p81 = por %p79, %p80
    %p83 = scmp.ne.s32.totalorder %s66, %s82
    %p84 = scmp.eq.s32.totalorder %s18, 0
    %p85 = por %p83, %p84
    %s86 = ssub.s32 %s19, %s31
    %p87 = scmp.eq.s32.totalorder %s86, 0
    %s89 = sadd.s32 %s88, 1
    %s90 = scalar_select %p87, %s88, %s89
    %p93 = pneg %p87
    %p94 = scmp.eq.s32.totalorder %s12, 1
    %p95 = por %p93, %p94
    %p96 = scmp.ne.s32.totalorder %s88, %s91
    %p97 = scmp.eq.s32.totalorder %s12, 0
    %p98 = por %p96, %p97
    %p99 = scmp.ne.s32.totalorder %s88, %s91
    %p100 = scmp.eq.s32.totalorder %s17, 1
    %p101 = por %p99, %p100
    %p102 = scmp.ne.s32.totalorder %s91, %s92
    %p103 = scmp.eq.s32.totalorder %s17, 0
    %p104 = por %p102, %p103
    %p105 = scmp.ne.s32.totalorder %s91, %s92
    %p106 = scmp.eq.s32.totalorder %s18, 1
    %p107 = por %p105, %p106
    %p109 = scmp.ne.s32.totalorder %s92, %s108
    %p110 = scmp.eq.s32.totalorder %s18, 0
    %p111 = por %p109, %p110
    %s113 = sadd.s32 %s112, 1
    %p116 = scmp.eq.s32.totalorder %s12, 1
    %p117 = scmp.ne.s32.totalorder %s112, %s114
    %p118 = scmp.eq.s32.totalorder %s12, 0
    %p119 = por %p117, %p118
    %p120 = scmp.ne.s32.totalorder %s112, %s114
    %p121 = scmp.eq.s32.totalorder %s17, 1
    %p122 = por %p120, %p121
    %p123 = scmp.ne.s32.totalorder %s114, %s115
    %p124 = scmp.eq.s32.totalorder %s17, 0
    %p125 = por %p123, %p124
    %p126 = scmp.ne.s32.totalorder %s114, %s115
    %p127 = scmp.eq.s32.totalorder %s18, 1
    %p128 = por %p126, %p127
    %p130 = scmp.ne.s32.totalorder %s115, %s129
    %p131 = scmp.eq.s32.totalorder %s18, 0
    %p132 = por %p130, %p131
    %s134 = sadd.s32 %s133, 1
    %p137 = scmp.eq.s32.totalorder %s12, 1
    %p138 = scmp.ne.s32.totalorder %s133, %s135
    %p139 = scmp.eq.s32.totalorder %s12, 0
    %p140 = por %p138, %p139
    %p141 = scmp.ne.s32.totalorder %s133, %s135
    %p142 = scmp.eq.s32.totalorder %s17, 1
    %p143 = por %p141, %p142
    %p144 = scmp.ne.s32.totalorder %s135, %s136
    %p145 = scmp.eq.s32.totalorder %s17, 0
    %p146 = por %p144, %p145
    %p147 = scmp.ne.s32.totalorder %s135, %s136
    %p148 = scmp.eq.s32.totalorder %s18, 1
    %p149 = por %p147, %p148
    %p151 = scmp.ne.s32.totalorder %s136, %s150
    %p152 = scmp.eq.s32.totalorder %s18, 0
    %p153 = por %p151, %p152
    %s154 = ssub.s32 %s19, %s31
    %p155 = scmp.eq.s32.totalorder %s154, 0
    %s157 = sadd.s32 %s156, 1
    %s158 = scalar_select %p155, %s156, %s157
    %p161 = pneg %p155
    %p162 = scmp.eq.s32.totalorder %s12, 1
    %p163 = por %p161, %p162
    %p164 = scmp.ne.s32.totalorder %s156, %s159
    %p165 = scmp.eq.s32.totalorder %s12, 0
    %p166 = por %p164, %p165
    %p167 = scmp.ne.s32.totalorder %s156, %s159
    %p168 = scmp.eq.s32.totalorder %s17, 1
    %p169 = por %p167, %p168
    %p170 = scmp.ne.s32.totalorder %s159, %s160
    %p171 = scmp.eq.s32.totalorder %s17, 0
    %p172 = por %p170, %p171
    %p173 = scmp.ne.s32.totalorder %s159, %s160
    %p174 = scmp.eq.s32.totalorder %s18, 1
    %p175 = por %p173, %p174
    %p177 = scmp.ne.s32.totalorder %s160, %s176
    %p178 = scmp.eq.s32.totalorder %s18, 0
    %p179 = por %p177, %p178
    %s180 = ssub.s32 %s19, %s31
    %p181 = scmp.eq.s32.totalorder %s180, 0
    %s183 = sadd.s32 %s182, 1
    %s184 = scalar_select %p181, %s182, %s183
    %p187 = pneg %p181
    %p188 = scmp.eq.s32.totalorder %s12, 1
    %p189 = por %p187, %p188
    %p190 = scmp.ne.s32.totalorder %s182, %s185
    %p191 = scmp.eq.s32.totalorder %s12, 0
    %p192 = por %p190, %p191
    %p193 = scmp.ne.s32.totalorder %s182, %s185
    %p194 = scmp.eq.s32.totalorder %s17, 1
    %p195 = por %p193, %p194
    %p196 = scmp.ne.s32.totalorder %s185, %s186
    %p197 = scmp.eq.s32.totalorder %s17, 0
    %p198 = por %p196, %p197
    %p199 = scmp.ne.s32.totalorder %s185, %s186
    %p200 = scmp.eq.s32.totalorder %s18, 1
    %p201 = por %p199, %p200
    %p203 = scmp.ne.s32.totalorder %s186, %s202
    %p204 = scmp.eq.s32.totalorder %s18, 0
    %p205 = por %p203, %p204
    %p206 = scmp.le.s32.totalorder 1, %s12
    %p207 = scmp.lt.s32.totalorder %s12, 3
    %p208 = pnand %p206, %p207
    %p209 = pneg %p208
    // Predicated region
    $region9: #{gnn_sage_forward.14} parent=5 // pred_check
      _
    $region10: #{gnn_sage_forward.14} parent=5 // pred_check_branch
      %211 = sbr.rel (%p208) target = $region12
    $region11: #{gnn_sage_forward.14} parent=5 // pred_region
      %s212 = ssub.s32 %s12, 1
      // Predicated region
      $region13: #{gnn_sage_forward.14} parent=11 // pred_check
        %p213 = pneg %p78
      $region14: #{gnn_sage_forward.14} parent=11 // pred_check_branch
        %215 = sbr.rel (%p213) target = $region16
      $region15: #{gnn_sage_forward.14} parent=11 // pred_region
        %s216 = smul.u32 16, %s22
        %p217 = scmp.lt.s32.totalorder %s216, 15
        %s218 = scalar_select %p217, %s216, 15
        %s219 = smul.addr %s218, 4
        %s220 = scalar_lea.vmem %s1, %s219
        %s221 = smul.u32 16, %s22
      $region16: #{gnn_sage_forward.14} parent=11 // pred_fallthru
        _
      // Predicated region
      $region17: #{gnn_sage_forward.14} parent=11 // pred_check
        %p222 = pneg %p125
      $region18: #{gnn_sage_forward.14} parent=11 // pred_check_branch
        %224 = sbr.rel (%p222) target = $region20
      $region19: #{gnn_sage_forward.14} parent=11 // pred_region
        _
      $region20: #{gnn_sage_forward.14} parent=11 // pred_fallthru
        _
      // Predicated region
      $region21: #{gnn_sage_forward.14} parent=11 // pred_check
        %p225 = pneg %p146
      $region22: #{gnn_sage_forward.14} parent=11 // pred_check_branch
        %227 = sbr.rel (%p225) target = $region24
      $region23: #{gnn_sage_forward.14} parent=11 // pred_region
        _
      $region24: #{gnn_sage_forward.14} parent=11 // pred_fallthru
        _
    $region12: #{gnn_sage_forward.14} parent=5 // pred_fallthru
      _
    %p228 = scmp.lt.s32.totalorder %s12, 2
    // Predicated region
    $region25: #{gnn_sage_forward.14} parent=5 // pred_check
      %p229 = pneg %p228
    $region26: #{gnn_sage_forward.14} parent=5 // pred_check_branch
      %231 = sbr.rel (%p229) target = $region28
    $region27: #{gnn_sage_forward.14} parent=5 // pred_region
      // Predicated region
      $region29: #{gnn_sage_forward.14} parent=27 // pred_check
        %p232 = pneg %p46
      $region30: #{gnn_sage_forward.14} parent=27 // pred_check_branch
        %234 = sbr.rel (%p232) target = $region32
      $region31: #{gnn_sage_forward.14} parent=27 // pred_region
        %s235 = smul.u32 2, %s19
        %p236 = scmp.lt.s32.totalorder %s235, 3
        %s237 = scalar_select %p236, %s235, 3
        %p238 = scmp.lt.s32.totalorder %s20, 0
        %s239 = scalar_select %p238, %s20, 0
        %s240 = sadd.s32 %s239, %s237
        %s241 = smul.addr %s240, 4
        %s242 = scalar_lea.vmem %s0, %s241
        %s243 = smul.u32 2, %s19
      $region32: #{gnn_sage_forward.14} parent=27 // pred_fallthru
        _
      // Predicated region
      $region33: #{gnn_sage_forward.14} parent=27 // pred_check
        %p244 = pneg %p98
      $region34: #{gnn_sage_forward.14} parent=27 // pred_check_branch
        %246 = sbr.rel (%p244) target = $region36
      $region35: #{gnn_sage_forward.14} parent=27 // pred_region
        %s247 = smul.u32 2, %s19
        %p248 = scmp.lt.s32.totalorder %s247, 3
        %s249 = scalar_select %p248, %s247, 3
        %s250 = smul.addr %s249, 4
        %s251 = scalar_lea.vmem %s2, %s250
        %s252 = smul.u32 2, %s19
      $region36: #{gnn_sage_forward.14} parent=27 // pred_fallthru
        _
      // Predicated region
      $region37: #{gnn_sage_forward.14} parent=27 // pred_check
        %p253 = pneg %p166
      $region38: #{gnn_sage_forward.14} parent=27 // pred_check_branch
        %255 = sbr.rel (%p253) target = $region40
      $region39: #{gnn_sage_forward.14} parent=27 // pred_region
        %s256 = smul.u32 2, %s19
        %p257 = scmp.lt.s32.totalorder %s256, 3
        %s258 = scalar_select %p257, %s256, 3
        %s259 = smul.addr %s258, 8
        %s260 = scalar_lea.vmem %s5, %s259
        %s261 = smul.u32 2, %s19
      $region40: #{gnn_sage_forward.14} parent=27 // pred_fallthru
        _
    $region28: #{gnn_sage_forward.14} parent=5 // pred_fallthru
      _
    %p262 = scmp.le.s32.totalorder 1, %s12
    %p263 = scmp.lt.s32.totalorder %s12, 3
    %p264 = pnand %p262, %p263
    %p265 = pneg %p264
    // Predicated region
    $region41: #{gnn_sage_forward.14} parent=5 // pred_check
      _
    $region42: #{gnn_sage_forward.14} parent=5 // pred_check_branch
      %267 = sbr.rel (%p264) target = $region44
    $region43: #{gnn_sage_forward.14} parent=5 // pred_region
      %s268 = ssub.s32 %s12, 1
      %s269 = smul.u32 2, %s21
      %p270 = scmp.lt.s32.totalorder %s269, 3
      %s271 = scalar_select %p270, %s269, 3
      %p272 = scmp.lt.s32.totalorder %s22, 0
      %s273 = scalar_select %p272, %s22, 0
      %s274 = sadd.s32 %s273, %s271
      %s275 = smul.addr %s274, 4
      %s276 = scalar_lea.vmem %s0, %s275
      %p277 = pneg %p52
      %p278 = pneg %p49
      %s279 = smul.u32 16, %s22
      %p280 = scmp.lt.s32.totalorder %s279, 15
      %s281 = scalar_select %p280, %s279, 15
      %s282 = smul.addr %s281, 4
      %s283 = scalar_lea.vmem %s1, %s282
      %p284 = pneg %p78
      %p285 = pneg %p75
      %s286 = smul.u32 2, %s21
      %p287 = scmp.lt.s32.totalorder %s286, 3
      %s288 = scalar_select %p287, %s286, 3
      %s289 = smul.addr %s288, 4
      %s290 = scalar_lea.vmem %s2, %s289
      %p291 = pneg %p104
      %p292 = pneg %p101
      %p293 = pneg %p125
      %p294 = pneg %p122
      %p295 = pneg %p146
      %p296 = pneg %p143
      %s297 = smul.u32 2, %s21
      %p298 = scmp.lt.s32.totalorder %s297, 3
      %s299 = scalar_select %p298, %s297, 3
      %s300 = smul.addr %s299, 8
      %s301 = scalar_lea.vmem %s5, %s300
      %p302 = pneg %p172
      %p303 = pneg %p169
      %p304 = pneg %p198
      %p305 = pneg %p195
      %s306 = smul.u32 2, %s21
      %p307 = scmp.lt.s32.totalorder %s306, 3
      %s308 = scalar_select %p307, %s306, 3
      %s309 = smul.addr %s308, 8
      %s310 = scalar_lea.vmem %s6, %s309
      %s311 = smul.u32 2, %s21
      %p312 = scmp.lt.s32.totalorder %s311, 3
      %s313 = scalar_select %p312, %s311, 3
      %p314 = scmp.lt.s32.totalorder %s22, 0
      %s315 = scalar_select %p314, %s22, 0
      %s316 = sadd.s32 %s315, %s313
      %s317 = smul.addr %s316, 4
      %s318 = scalar_lea.vmem %s0, %s317
      %s319 = smul.u32 2, %s21
      %s320 = smul.u32 16, %s22
      %p321 = scmp.lt.s32.totalorder %s320, 15
      %s322 = scalar_select %p321, %s320, 15
      %s323 = smul.addr %s322, 4
      %s324 = scalar_lea.vmem %s1, %s323
      %s325 = smul.u32 16, %s22
      %s326 = smul.u32 2, %s21
      %p327 = scmp.lt.s32.totalorder %s326, 3
      %s328 = scalar_select %p327, %s326, 3
      %s329 = smul.addr %s328, 4
      %s330 = scalar_lea.vmem %s2, %s329
      %s331 = smul.u32 2, %s21
      %s332 = smul.u32 2, %s21
      %p333 = scmp.lt.s32.totalorder %s332, 3
      %s334 = scalar_select %p333, %s332, 3
      %s335 = smul.addr %s334, 8
      %s336 = scalar_lea.vmem %s5, %s335
      %s337 = smul.u32 2, %s21
      %s338 = smul.u32 2, %s21
      %p339 = scmp.lt.s32.totalorder %s338, 3
      %s340 = scalar_select %p339, %s338, 3
      %s341 = smul.addr %s340, 8
      %s342 = scalar_lea.vmem %s6, %s341
      %s343 = smul.u32 2, %s21
      %p345 = scmp.eq.s32.totalorder %s22, 0
      // Predicated region
      $region45: #{gnn_sage_forward.14} parent=43 // pred_check
        %p346 = pneg %p345
      $region46: #{gnn_sage_forward.14} parent=43 // pred_check_branch
        %348 = sbr.rel (%p346) target = $region48
      $region47: #{gnn_sage_forward.14} parent=43 // pred_region
        %349 = vst [vmem:[#allocation2] sm:$0xff] 0.0
        %350 = vst [vmem:[#allocation2 + $0x8] sm:$0xff] 0.0
      $region48: #{gnn_sage_forward.14} parent=43 // pred_fallthru
        _
      %v351 = vld [vmem:[#allocation2] sm:$0xff]
      %v352 = vld [vmem:[#allocation2 + $0x8] sm:$0xff]
      %v353 = vld [vmem:[%s318] sm:$0xf]
      %v354 = vld [vmem:[%s318 + $0x4] sm:$0xf]
      %v355 = vld [vmem:[%s324] sm:$0xf]
      %v356 = vld [vmem:[%s324 + $0x4] sm:$0xf]
      %v357 = vld [vmem:[%s324 + $0x8] sm:$0xf]
      %v358 = vld [vmem:[%s324 + $0xc] sm:$0xf]
      %v359 = vld [vmem:[%s324 + $0x10] sm:$0xf]
      %v360 = vld [vmem:[%s324 + $0x14] sm:$0xf]
      %v361 = vld [vmem:[%s324 + $0x18] sm:$0xf]
      %v362 = vld [vmem:[%s324 + $0x1c] sm:$0xf]
      %v363 = vld [vmem:[%s324 + $0x20] sm:$0xf]
      %v364 = vld [vmem:[%s324 + $0x24] sm:$0xf]
      %v365 = vld [vmem:[%s324 + $0x28] sm:$0xf]
      %v366 = vld [vmem:[%s324 + $0x2c] sm:$0xf]
      %v367 = vld [vmem:[%s324 + $0x30] sm:$0xf]
      %v368 = vld [vmem:[%s324 + $0x34] sm:$0xf]
      %v369 = vld [vmem:[%s324 + $0x38] sm:$0xf]
      %v370 = vld [vmem:[%s324 + $0x3c] sm:$0xf]
      %v373 = vunpack.c.l.b16 %v353
      %v374 = vunpack.c.l.b16 %v354
      %v375 = vpack.c.b16 %v374, %v373
      %v393 = vunpack.c.l.b16 %v355
      %v394 = vunpack.c.l.b16 %v356
      %v395 = vunpack.c.l.b16 %v357
      %v396 = vunpack.c.l.b16 %v358
      %v397 = vunpack.c.l.b16 %v359
      %v398 = vunpack.c.l.b16 %v360
      %v399 = vunpack.c.l.b16 %v361
      %v400 = vunpack.c.l.b16 %v362
      %v401 = vunpack.c.l.b16 %v363
      %v402 = vunpack.c.l.b16 %v364
      %v403 = vunpack.c.l.b16 %v365
      %v404 = vunpack.c.l.b16 %v366
      %v405 = vunpack.c.l.b16 %v367
      %v406 = vunpack.c.l.b16 %v368
      %v407 = vunpack.c.l.b16 %v369
      %v408 = vunpack.c.l.b16 %v370
      %v409 = vpack.c.b16 %v394, %v393
      %v410 = vpack.c.b16 %v396, %v395
      %v411 = vpack.c.b16 %v398, %v397
      %v412 = vpack.c.b16 %v400, %v399
      %v413 = vpack.c.b16 %v402, %v401
      %v414 = vpack.c.b16 %v404, %v403
      %v415 = vpack.c.b16 %v406, %v405
      %v416 = vpack.c.b16 %v408, %v407
      %425 = vmatprep.subr.bf16.mxu0 0
      %426 = vmatpush1.bf16.msra.mxu0 %v409
      %427 = vmatprep.subr.bf16.mxu0 0
      %428 = vmatpush1.bf16.msra.mxu0 %v410
      %429 = vmatprep.subr.bf16.mxu0 0
      %430 = vmatpush1.bf16.msra.mxu0 %v411
      %431 = vmatprep.subr.bf16.mxu0 0
      %432 = vmatpush1.bf16.msra.mxu0 %v412
      %433 = vmatprep.subr.bf16.mxu0 0
      %434 = vmatpush1.bf16.msra.mxu0 %v413
      %435 = vmatprep.subr.bf16.mxu0 0
      %436 = vmatpush1.bf16.msra.mxu0 %v414
      %437 = vmatprep.subr.bf16.mxu0 0
      %438 = vmatpush1.bf16.msra.mxu0 %v415
      %439 = vmatprep.subr.bf16.mxu0 0
      %440 = vmatpush1.bf16.msra.mxu0 %v416
      %441 = vmatprep.subr.bf16.mxu0 0
      %442 = vmatpush1.bf16.msra.mxu0 0
      %443 = vmatprep.subr.bf16.mxu0 0
      %444 = vmatpush1.bf16.msra.mxu0 0
      %445 = vmatprep.subr.bf16.mxu0 0
      %446 = vmatpush1.bf16.msra.mxu0 0
      %447 = vmatprep.subr.bf16.mxu0 0
      %448 = vmatpush1.bf16.msra.mxu0 0
      %449 = vmatprep.subr.bf16.mxu0 0
      %450 = vmatpush1.bf16.msra.mxu0 0
      %451 = vmatprep.subr.bf16.mxu0 0
      %452 = vmatpush1.bf16.msra.mxu0 0
      %453 = vmatprep.subr.bf16.mxu0 0
      %454 = vmatpush1.bf16.msra.mxu0 0
      %455 = vmatprep.subr.bf16.mxu0 0
      %456 = vmatpush1.bf16.msra.mxu0 0
      %457 = vmatprep.mubr.bf16.mxu0 0
      %458 = vmatmul.mubr.bf16.gmra.mrb[0].mxu0 %v375
      %v459 = vpop.f32.mrb[0].mxu0
      %v460 = vadd.f32 0.0, %v459
      %v461 = vpop.f32.mrb[0].mxu0
      %v462 = vpop.f32.mrb[0].mxu0
      %v463 = vadd.f32 0.0, %v462
      %v464 = vpop.f32.mrb[0].mxu0
      %465 = vdwg.mxu0
      %v466 = vadd.f32 %v351, %v460
      %v467 = vadd.f32 %v352, %v463
      %468 = vst [vmem:[#allocation2] sm:$0xff] %v466
      %469 = vst [vmem:[#allocation2 + $0x8] sm:$0xff] %v467
      // Predicated region
      $region49: #{gnn_sage_forward.14} parent=43 // pred_check
        %p470 = pneg %p345
      $region50: #{gnn_sage_forward.14} parent=43 // pred_check_branch
        %472 = sbr.rel (%p470) target = $region52
      $region51: #{gnn_sage_forward.14} parent=43 // pred_region
        %v473 = vld [vmem:[#allocation2] sm:$0xff]
        %v474 = vld [vmem:[#allocation2 + $0x8] sm:$0xff]
        %v475 = vld [vmem:[%s336] sm:$0xff]
        %v476 = vld [vmem:[%s336 + $0x8] sm:$0xff]
        %478 = vset.pattern.permute.xlu0 0
        %479 = vperm.xlu0 %478, %v475
        %v480 = vpop.permute.xlu0 %479
        %483 = vset.pattern.permute.xlu0 0
        %484 = vperm.xlu0 %483, %v476
        %v485 = vpop.permute.xlu0 %484
        %v487 = vmul.f32 %v473, %v480
        %v488 = vmul.f32 %v474, %v485
        %v489 = vld [vmem:[%s330] sm:$0xf]
        %v490 = vld [vmem:[%s330 + $0x4] sm:$0xf]
        %v491 = vld [vmem:[%s3] sm:$0xf]
        %v492 = vld [vmem:[%s3 + $0x4] sm:$0xf]
        %v493 = vld [vmem:[%s3 + $0x8] sm:$0xf]
        %v494 = vld [vmem:[%s3 + $0xc] sm:$0xf]
        %v495 = vld [vmem:[%s3 + $0x10] sm:$0xf]
        %v496 = vld [vmem:[%s3 + $0x14] sm:$0xf]
        %v497 = vld [vmem:[%s3 + $0x18] sm:$0xf]
        %v498 = vld [vmem:[%s3 + $0x1c] sm:$0xf]
        %v499 = vld [vmem:[%s3 + $0x20] sm:$0xf]
        %v500 = vld [vmem:[%s3 + $0x24] sm:$0xf]
        %v501 = vld [vmem:[%s3 + $0x28] sm:$0xf]
        %v502 = vld [vmem:[%s3 + $0x2c] sm:$0xf]
        %v503 = vld [vmem:[%s3 + $0x30] sm:$0xf]
        %v504 = vld [vmem:[%s3 + $0x34] sm:$0xf]
        %v505 = vld [vmem:[%s3 + $0x38] sm:$0xf]
        %v506 = vld [vmem:[%s3 + $0x3c] sm:$0xf]
        %v507 = vld [vmem:[%s4] sm:$0x1]
        %v509 = vlaneseq
        %v510 = vshrl.u32 %v509, 7
        %v511 = vsub.s32 0, %v510
        %v512 = vrot.slane %v507, %v511
        %v516 = vunpack.c.l.b16 %v489
        %v517 = vunpack.c.l.b16 %v490
        %v518 = vpack.c.b16 %v517, %v516
        %v536 = vunpack.c.l.b16 %v491
        %v537 = vunpack.c.l.b16 %v492
        %v538 = vunpack.c.l.b16 %v493
        %v539 = vunpack.c.l.b16 %v494
        %v540 = vunpack.c.l.b16 %v495
        %v541 = vunpack.c.l.b16 %v496
        %v542 = vunpack.c.l.b16 %v497
        %v543 = vunpack.c.l.b16 %v498
        %v544 = vunpack.c.l.b16 %v499
        %v545 = vunpack.c.l.b16 %v500
        %v546 = vunpack.c.l.b16 %v501
        %v547 = vunpack.c.l.b16 %v502
        %v548 = vunpack.c.l.b16 %v503
        %v549 = vunpack.c.l.b16 %v504
        %v550 = vunpack.c.l.b16 %v505
        %v551 = vunpack.c.l.b16 %v506
        %v552 = vpack.c.b16 %v537, %v536
        %v553 = vpack.c.b16 %v539, %v538
        %v554 = vpack.c.b16 %v541, %v540
        %v555 = vpack.c.b16 %v543, %v542
        %v556 = vpack.c.b16 %v545, %v544
        %v557 = vpack.c.b16 %v547, %v546
        %v558 = vpack.c.b16 %v549, %v548
        %v559 = vpack.c.b16 %v551, %v550
        %568 = vmatprep.subr.bf16.mxu0 0
        %569 = vmatpush1.bf16.msra.mxu0 %v552
        %570 = vmatprep.subr.bf16.mxu0 0
        %571 = vmatpush1.bf16.msra.mxu0 %v553
        %572 = vmatprep.subr.bf16.mxu0 0
        %573 = vmatpush1.bf16.msra.mxu0 %v554
        %574 = vmatprep.subr.bf16.mxu0 0
        %575 = vmatpush1.bf16.msra.mxu0 %v555
        %576 = vmatprep.subr.bf16.mxu0 0
        %577 = vmatpush1.bf16.msra.mxu0 %v556
        %578 = vmatprep.subr.bf16.mxu0 0
        %579 = vmatpush1.bf16.msra.mxu0 %v557
        %580 = vmatprep.subr.bf16.mxu0 0
        %581 = vmatpush1.bf16.msra.mxu0 %v558
        %582 = vmatprep.subr.bf16.mxu0 0
        %583 = vmatpush1.bf16.msra.mxu0 %v559
        %584 = vmatprep.subr.bf16.mxu0 0
        %585 = vmatpush1.bf16.msra.mxu0 0
        %586 = vmatprep.subr.bf16.mxu0 0
        %587 = vmatpush1.bf16.msra.mxu0 0
        %588 = vmatprep.subr.bf16.mxu0 0
        %589 = vmatpush1.bf16.msra.mxu0 0
        %590 = vmatprep.subr.bf16.mxu0 0
        %591 = vmatpush1.bf16.msra.mxu0 0
        %592 = vmatprep.subr.bf16.mxu0 0
        %593 = vmatpush1.bf16.msra.mxu0 0
        %594 = vmatprep.subr.bf16.mxu0 0
        %595 = vmatpush1.bf16.msra.mxu0 0
        %596 = vmatprep.subr.bf16.mxu0 0
        %597 = vmatpush1.bf16.msra.mxu0 0
        %598 = vmatprep.subr.bf16.mxu0 0
        %599 = vmatpush1.bf16.msra.mxu0 0
        %600 = vmatprep.mubr.bf16.mxu0 0
        %601 = vmatmul.mubr.bf16.gmra.mrb[0].mxu0 %v518
        %v602 = vpop.f32.mrb[0].mxu0
        %v603 = vadd.f32 %v512, %v602
        %v604 = vpop.f32.mrb[0].mxu0
        %v605 = vpop.f32.mrb[0].mxu0
        %v606 = vadd.f32 %v512, %v605
        %v607 = vpop.f32.mrb[0].mxu0
        %608 = vdwg.mxu0
        %v609 = vadd.f32 %v487, %v603
        %v610 = vadd.f32 %v488, %v606
        %611 = vst [vmem:[%s342] sm:$0xff] %v609
        %612 = vst [vmem:[%s342 + $0x8] sm:$0xff] %v610
      $region52: #{gnn_sage_forward.14} parent=43 // pred_fallthru
        _
      %s613 = smul.u32 2, %s21
      %p614 = scmp.lt.s32.totalorder %s613, 3
      %s615 = scalar_select %p614, %s613, 3
      %s616 = smul.addr %s615, 8
      %s617 = scalar_lea.vmem %s6, %s616
      // Predicated region
      $region53: #{gnn_sage_forward.14} parent=43 // pred_check
        %p618 = pneg %p195
      $region54: #{gnn_sage_forward.14} parent=43 // pred_check_branch
        %620 = sbr.rel (%p618) target = $region56
      $region55: #{gnn_sage_forward.14} parent=43 // pred_region
        %s621 = smul.u32 2, %s21
      $region56: #{gnn_sage_forward.14} parent=43 // pred_fallthru
        _
    $region44: #{gnn_sage_forward.14} parent=5 // pred_fallthru
      _
    %p622 = scmp.le.s32.totalorder 2, %s12
    // Predicated region
    $region57: #{gnn_sage_forward.14} parent=5 // pred_check
      %p623 = pneg %p622
    $region58: #{gnn_sage_forward.14} parent=5 // pred_check_branch
      %625 = sbr.rel (%p623) target = $region60
    $region59: #{gnn_sage_forward.14} parent=5 // pred_region
      %s626 = ssub.s32 %s12, 2
      // Predicated region
      $region61: #{gnn_sage_forward.14} parent=59 // pred_check
        %p627 = pneg %p201
      $region62: #{gnn_sage_forward.14} parent=59 // pred_check_branch
        %629 = sbr.rel (%p627) target = $region64
      $region63: #{gnn_sage_forward.14} parent=59 // pred_region
        %s630 = smul.u32 2, %s23
        %p631 = scmp.lt.s32.totalorder %s630, 3
        %s632 = scalar_select %p631, %s630, 3
        %s633 = smul.addr %s632, 8
        %s634 = scalar_lea.vmem %s6, %s633
      $region64: #{gnn_sage_forward.14} parent=59 // pred_fallthru
        _
    $region60: #{gnn_sage_forward.14} parent=5 // pred_fallthru
      _
  $region6: #{gnn_sage_forward.14} parent=0 // loop_footer
    %s16 = sadd.s32 1, %s12
  $region7: #{gnn_sage_forward.14} parent=0 // loop_footer_branch
    %11 = sbr.rel target = $region3
  $region8: #{gnn_sage_forward.14} parent=0 // loop_exit
    _

// kernel: gnn_sage_forward.11
$region0: #{gnn_sage_forward.11}
  #allocation0 [shape = 'u32[]', space=smem, size = 0x4, offset = 0x4, fixed_abs, tag = 'smem constant byte address 0x4 - core index']
  #allocation1 [shape = 'u32[144,128]{1,0:T(1,128)}', space=vmem, size = 0x12000, scoped, tag = 'internal scratch']
  #allocation2 [shape = 'f32[16,128]{1,0:T(8,128)}', space=vmem, size = 0x2000, scoped, tag = 'scratch operand']
  %s0 = inlined_call_operand.vmem [shape: bf16[16,128], index: 0, kind: input, shape index: {}]
  %s1 = inlined_call_operand.vmem [shape: bf16[128,128], index: 1, kind: input, shape index: {}]
  %s2 = inlined_call_operand.vmem [shape: bf16[16,128], index: 2, kind: input, shape index: {}]
  %s3 = inlined_call_operand.vmem [shape: bf16[128,128], index: 3, kind: input, shape index: {}]
  %s4 = inlined_call_operand.vmem [shape: f32[1,128], index: 4, kind: input, shape index: {}]
  %s5 = inlined_call_operand.vmem [shape: f32[16,1], index: 5, kind: input, shape index: {}]
  %s6 = inlined_call_operand.vmem [shape: bf16[16,128], index: 6, kind: output, shape index: {}]
  %s7 = sld [smem:[#allocation0]]
  $region42: #{gnn_sage_forward.11} parent=0
    _
  %s9 = ssub.s32 1, %s7
  %s10 = scalar_select 0, %s9, %s7
  // Predicated region
  $region2: #{gnn_sage_forward.11} parent=0 // pred_check
    _
  $region3: #{gnn_sage_forward.11} parent=0 // pred_check_branch
    %12 = sbr.rel (0) target = $region5
  $region4: #{gnn_sage_forward.11} parent=0 // pred_region
    _
  $region5: #{gnn_sage_forward.11} parent=0 // pred_fallthru
    _
  // Predicated region
  $region6: #{gnn_sage_forward.11} parent=0 // pred_check
    _
  $region7: #{gnn_sage_forward.11} parent=0 // pred_check_branch
    %14 = sbr.rel (0) target = $region9
  $region8: #{gnn_sage_forward.11} parent=0 // pred_region
    _
  $region9: #{gnn_sage_forward.11} parent=0 // pred_fallthru
    _
  // Predicated region
  $region10: #{gnn_sage_forward.11} parent=0 // pred_check
    _
  $region11: #{gnn_sage_forward.11} parent=0 // pred_check_branch
    %16 = sbr.rel (0) target = $region13
  $region12: #{gnn_sage_forward.11} parent=0 // pred_region
    _
  $region13: #{gnn_sage_forward.11} parent=0 // pred_fallthru
    _
  // Predicated region
  $region14: #{gnn_sage_forward.11} parent=0 // pred_check
    _
  $region15: #{gnn_sage_forward.11} parent=0 // pred_check_branch
    %18 = sbr.rel (0) target = $region17
  $region16: #{gnn_sage_forward.11} parent=0 // pred_region
    _
  $region17: #{gnn_sage_forward.11} parent=0 // pred_fallthru
    _
  // Predicated region
  $region18: #{gnn_sage_forward.11} parent=0 // pred_check
    _
  $region19: #{gnn_sage_forward.11} parent=0 // pred_check_branch
    %20 = sbr.rel (0) target = $region21
  $region20: #{gnn_sage_forward.11} parent=0 // pred_region
    _
  $region21: #{gnn_sage_forward.11} parent=0 // pred_fallthru
    _
  // Predicated region
  $region22: #{gnn_sage_forward.11} parent=0 // pred_check
    _
  $region23: #{gnn_sage_forward.11} parent=0 // pred_check_branch
    %22 = sbr.rel (0) target = $region25
  $region24: #{gnn_sage_forward.11} parent=0 // pred_region
    _
  $region25: #{gnn_sage_forward.11} parent=0 // pred_fallthru
    _
  %p24 = scmp.eq.s32.totalorder 0, 0
  // Predicated region
  $region26: #{gnn_sage_forward.11} parent=0 // pred_check
    %p25 = pneg %p24
  $region27: #{gnn_sage_forward.11} parent=0 // pred_check_branch
    %27 = sbr.rel (%p25) target = $region29
  $region28: #{gnn_sage_forward.11} parent=0 // pred_region
    %28 = vst [vmem:[#allocation2] sm:$0xff] 0.0
    %29 = vst [vmem:[#allocation2 + $0x8] sm:$0xff] 0.0
  $region29: #{gnn_sage_forward.11} parent=0 // pred_fallthru
    _
  %v30 = vld [vmem:[#allocation2] sm:$0xff]
  %v31 = vld [vmem:[#allocation2 + $0x8] sm:$0xff]
  %v32 = vld [vmem:[%s0] sm:$0xf]
  %v33 = vld [vmem:[%s0 + $0x4] sm:$0xf]
  %v34 = vld [vmem:[%s1] sm:$0xf]
  %v35 = vld [vmem:[%s1 + $0x4] sm:$0xf]
  %v36 = vld [vmem:[%s1 + $0x8] sm:$0xf]
  %v37 = vld [vmem:[%s1 + $0xc] sm:$0xf]
  %v38 = vld [vmem:[%s1 + $0x10] sm:$0xf]
  %v39 = vld [vmem:[%s1 + $0x14] sm:$0xf]
  %v40 = vld [vmem:[%s1 + $0x18] sm:$0xf]
  %v41 = vld [vmem:[%s1 + $0x1c] sm:$0xf]
  %v42 = vld [vmem:[%s1 + $0x20] sm:$0xf]
  %v43 = vld [vmem:[%s1 + $0x24] sm:$0xf]
  %v44 = vld [vmem:[%s1 + $0x28] sm:$0xf]
  %v45 = vld [vmem:[%s1 + $0x2c] sm:$0xf]
  %v46 = vld [vmem:[%s1 + $0x30] sm:$0xf]
  %v47 = vld [vmem:[%s1 + $0x34] sm:$0xf]
  %v48 = vld [vmem:[%s1 + $0x38] sm:$0xf]
  %v49 = vld [vmem:[%s1 + $0x3c] sm:$0xf]
  %v52 = vunpack.c.l.b16 %v32
  %v53 = vunpack.c.l.b16 %v33
  %v54 = vpack.c.b16 %v53, %v52
  %v72 = vunpack.c.l.b16 %v34
  %v73 = vunpack.c.l.b16 %v35
  %v74 = vunpack.c.l.b16 %v36
  %v75 = vunpack.c.l.b16 %v37
  %v76 = vunpack.c.l.b16 %v38
  %v77 = vunpack.c.l.b16 %v39
  %v78 = vunpack.c.l.b16 %v40
  %v79 = vunpack.c.l.b16 %v41
  %v80 = vunpack.c.l.b16 %v42
  %v81 = vunpack.c.l.b16 %v43
  %v82 = vunpack.c.l.b16 %v44
  %v83 = vunpack.c.l.b16 %v45
  %v84 = vunpack.c.l.b16 %v46
  %v85 = vunpack.c.l.b16 %v47
  %v86 = vunpack.c.l.b16 %v48
  %v87 = vunpack.c.l.b16 %v49
  %v88 = vpack.c.b16 %v73, %v72
  %v89 = vpack.c.b16 %v75, %v74
  %v90 = vpack.c.b16 %v77, %v76
  %v91 = vpack.c.b16 %v79, %v78
  %v92 = vpack.c.b16 %v81, %v80
  %v93 = vpack.c.b16 %v83, %v82
  %v94 = vpack.c.b16 %v85, %v84
  %v95 = vpack.c.b16 %v87, %v86
  %104 = vmatprep.subr.bf16.mxu0 0
  %105 = vmatpush1.bf16.msra.mxu0 %v88
  %106 = vmatprep.subr.bf16.mxu0 0
  %107 = vmatpush1.bf16.msra.mxu0 %v89
  %108 = vmatprep.subr.bf16.mxu0 0
  %109 = vmatpush1.bf16.msra.mxu0 %v90
  %110 = vmatprep.subr.bf16.mxu0 0
  %111 = vmatpush1.bf16.msra.mxu0 %v91
  %112 = vmatprep.subr.bf16.mxu0 0
  %113 = vmatpush1.bf16.msra.mxu0 %v92
  %114 = vmatprep.subr.bf16.mxu0 0
  %115 = vmatpush1.bf16.msra.mxu0 %v93
  %116 = vmatprep.subr.bf16.mxu0 0
  %117 = vmatpush1.bf16.msra.mxu0 %v94
  %118 = vmatprep.subr.bf16.mxu0 0
  %119 = vmatpush1.bf16.msra.mxu0 %v95
  %120 = vmatprep.subr.bf16.mxu0 0
  %121 = vmatpush1.bf16.msra.mxu0 0
  %122 = vmatprep.subr.bf16.mxu0 0
  %123 = vmatpush1.bf16.msra.mxu0 0
  %124 = vmatprep.subr.bf16.mxu0 0
  %125 = vmatpush1.bf16.msra.mxu0 0
  %126 = vmatprep.subr.bf16.mxu0 0
  %127 = vmatpush1.bf16.msra.mxu0 0
  %128 = vmatprep.subr.bf16.mxu0 0
  %129 = vmatpush1.bf16.msra.mxu0 0
  %130 = vmatprep.subr.bf16.mxu0 0
  %131 = vmatpush1.bf16.msra.mxu0 0
  %132 = vmatprep.subr.bf16.mxu0 0
  %133 = vmatpush1.bf16.msra.mxu0 0
  %134 = vmatprep.subr.bf16.mxu0 0
  %135 = vmatpush1.bf16.msra.mxu0 0
  %136 = vmatprep.mubr.bf16.mxu0 0
  %137 = vmatmul.mubr.bf16.gmra.mrb[0].mxu0 %v54
  %v138 = vpop.f32.mrb[0].mxu0
  %v139 = vadd.f32 0.0, %v138
  %v140 = vpop.f32.mrb[0].mxu0
  %v141 = vpop.f32.mrb[0].mxu0
  %v142 = vadd.f32 0.0, %v141
  %v143 = vpop.f32.mrb[0].mxu0
  %144 = vdwg.mxu0
  %v145 = vadd.f32 %v30, %v139
  %v146 = vadd.f32 %v31, %v142
  %147 = vst [vmem:[#allocation2] sm:$0xff] %v145
  %148 = vst [vmem:[#allocation2 + $0x8] sm:$0xff] %v146
  // Predicated region
  $region30: #{gnn_sage_forward.11} parent=0 // pred_check
    %p149 = pneg %p24
  $region31: #{gnn_sage_forward.11} parent=0 // pred_check_branch
    %151 = sbr.rel (%p149) target = $region33
  $region32: #{gnn_sage_forward.11} parent=0 // pred_region
    %v152 = vld [vmem:[#allocation2] sm:$0xff]
    %v153 = vld [vmem:[#allocation2 + $0x8] sm:$0xff]
    %v154 = vld [vmem:[%s5] sm:$0xff]
    %v155 = vld [vmem:[%s5 + $0x8] sm:$0xff]
    %157 = vset.pattern.permute.xlu0 0
    %158 = vperm.xlu0 %157, %v154
    %v159 = vpop.permute.xlu0 %158
    %162 = vset.pattern.permute.xlu0 0
    %163 = vperm.xlu0 %162, %v155
    %v164 = vpop.permute.xlu0 %163
    %v166 = vmul.f32 %v152, %v159
    %v167 = vmul.f32 %v153, %v164
    %v168 = vld [vmem:[%s2] sm:$0xf]
    %v169 = vld [vmem:[%s2 + $0x4] sm:$0xf]
    %v170 = vld [vmem:[%s3] sm:$0xf]
    %v171 = vld [vmem:[%s3 + $0x4] sm:$0xf]
    %v172 = vld [vmem:[%s3 + $0x8] sm:$0xf]
    %v173 = vld [vmem:[%s3 + $0xc] sm:$0xf]
    %v174 = vld [vmem:[%s3 + $0x10] sm:$0xf]
    %v175 = vld [vmem:[%s3 + $0x14] sm:$0xf]
    %v176 = vld [vmem:[%s3 + $0x18] sm:$0xf]
    %v177 = vld [vmem:[%s3 + $0x1c] sm:$0xf]
    %v178 = vld [vmem:[%s3 + $0x20] sm:$0xf]
    %v179 = vld [vmem:[%s3 + $0x24] sm:$0xf]
    %v180 = vld [vmem:[%s3 + $0x28] sm:$0xf]
    %v181 = vld [vmem:[%s3 + $0x2c] sm:$0xf]
    %v182 = vld [vmem:[%s3 + $0x30] sm:$0xf]
    %v183 = vld [vmem:[%s3 + $0x34] sm:$0xf]
    %v184 = vld [vmem:[%s3 + $0x38] sm:$0xf]
    %v185 = vld [vmem:[%s3 + $0x3c] sm:$0xf]
    %v186 = vld [vmem:[%s4] sm:$0x1]
    %v188 = vlaneseq
    %v189 = vshrl.u32 %v188, 7
    %v190 = vsub.s32 0, %v189
    %v191 = vrot.slane %v186, %v190
    %v195 = vunpack.c.l.b16 %v168
    %v196 = vunpack.c.l.b16 %v169
    %v197 = vpack.c.b16 %v196, %v195
    %v215 = vunpack.c.l.b16 %v170
    %v216 = vunpack.c.l.b16 %v171
    %v217 = vunpack.c.l.b16 %v172
    %v218 = vunpack.c.l.b16 %v173
    %v219 = vunpack.c.l.b16 %v174
    %v220 = vunpack.c.l.b16 %v175
    %v221 = vunpack.c.l.b16 %v176
    %v222 = vunpack.c.l.b16 %v177
    %v223 = vunpack.c.l.b16 %v178
    %v224 = vunpack.c.l.b16 %v179
    %v225 = vunpack.c.l.b16 %v180
    %v226 = vunpack.c.l.b16 %v181
    %v227 = vunpack.c.l.b16 %v182
    %v228 = vunpack.c.l.b16 %v183
    %v229 = vunpack.c.l.b16 %v184
    %v230 = vunpack.c.l.b16 %v185
    %v231 = vpack.c.b16 %v216, %v215
    %v232 = vpack.c.b16 %v218, %v217
    %v233 = vpack.c.b16 %v220, %v219
    %v234 = vpack.c.b16 %v222, %v221
    %v235 = vpack.c.b16 %v224, %v223
    %v236 = vpack.c.b16 %v226, %v225
    %v237 = vpack.c.b16 %v228, %v227
    %v238 = vpack.c.b16 %v230, %v229
    %247 = vmatprep.subr.bf16.mxu0 0
    %248 = vmatpush1.bf16.msra.mxu0 %v231
    %249 = vmatprep.subr.bf16.mxu0 0
    %250 = vmatpush1.bf16.msra.mxu0 %v232
    %251 = vmatprep.subr.bf16.mxu0 0
    %252 = vmatpush1.bf16.msra.mxu0 %v233
    %253 = vmatprep.subr.bf16.mxu0 0
    %254 = vmatpush1.bf16.msra.mxu0 %v234
    %255 = vmatprep.subr.bf16.mxu0 0
    %256 = vmatpush1.bf16.msra.mxu0 %v235
    %257 = vmatprep.subr.bf16.mxu0 0
    %258 = vmatpush1.bf16.msra.mxu0 %v236
    %259 = vmatprep.subr.bf16.mxu0 0
    %260 = vmatpush1.bf16.msra.mxu0 %v237
    %261 = vmatprep.subr.bf16.mxu0 0
    %262 = vmatpush1.bf16.msra.mxu0 %v238
    %263 = vmatprep.subr.bf16.mxu0 0
    %264 = vmatpush1.bf16.msra.mxu0 0
    %265 = vmatprep.subr.bf16.mxu0 0
    %266 = vmatpush1.bf16.msra.mxu0 0
    %267 = vmatprep.subr.bf16.mxu0 0
    %268 = vmatpush1.bf16.msra.mxu0 0
    %269 = vmatprep.subr.bf16.mxu0 0
    %270 = vmatpush1.bf16.msra.mxu0 0
    %271 = vmatprep.subr.bf16.mxu0 0
    %272 = vmatpush1.bf16.msra.mxu0 0
    %273 = vmatprep.subr.bf16.mxu0 0
    %274 = vmatpush1.bf16.msra.mxu0 0
    %275 = vmatprep.subr.bf16.mxu0 0
    %276 = vmatpush1.bf16.msra.mxu0 0
    %277 = vmatprep.subr.bf16.mxu0 0
    %278 = vmatpush1.bf16.msra.mxu0 0
    %279 = vmatprep.mubr.bf16.mxu0 0
    %280 = vmatmul.mubr.bf16.gmra.mrb[0].mxu0 %v197
    %v281 = vpop.f32.mrb[0].mxu0
    %v282 = vadd.f32 %v191, %v281
    %v283 = vpop.f32.mrb[0].mxu0
    %v284 = vpop.f32.mrb[0].mxu0
    %v285 = vadd.f32 %v191, %v284
    %v286 = vpop.f32.mrb[0].mxu0
    %287 = vdwg.mxu0
    %v288 = vadd.f32 %v166, %v282
    %v289 = vadd.f32 %v167, %v285
    %vm290 = vcmp.ge.f32.partialorder %v288, 0.0
    %vm291 = vcmp.ge.f32.partialorder %v289, 0.0
    %v292 = vmul.f32 %v288, 0.01
    %v293 = vmul.f32 %v289, 0.01
    %v294 = vsel %vm290, %v288, %v292
    %v295 = vsel %vm291, %v289, %v293
    %v296 = vpack.c.bf16 %v295, %v294
    %v298 = vunpack.c.l.b16 %v296
    %v299 = vunpack.c.h.b16 %v296
    %v300 = vpack.c.b16 %v298, %v298
    %v301 = vpack.c.b16 %v299, %v299
    %304 = vst [vmem:[%s6] sm:$0xf] %v300
    %305 = vst [vmem:[%s6 + $0x4] sm:$0xf] %v301
  $region33: #{gnn_sage_forward.11} parent=0 // pred_fallthru
    _
  // Predicated region
  $region34: #{gnn_sage_forward.11} parent=0 // pred_check
    _
  $region35: #{gnn_sage_forward.11} parent=0 // pred_check_branch
    %307 = sbr.rel (0) target = $region37
  $region36: #{gnn_sage_forward.11} parent=0 // pred_region
    _
  $region37: #{gnn_sage_forward.11} parent=0 // pred_fallthru
    _
  // Predicated region
  $region38: #{gnn_sage_forward.11} parent=0 // pred_check
    _
  $region39: #{gnn_sage_forward.11} parent=0 // pred_check_branch
    %309 = sbr.rel (0) target = $region41
  $region40: #{gnn_sage_forward.11} parent=0 // pred_region
    _
  $region41: #{gnn_sage_forward.11} parent=0 // pred_fallthru
    _

</llo_original>
